<compile_context>
chip_gen: v7x
topology: tpu7x:2x2x1
jax: 0.10.0
libtpu: 0.0.40
codegen_flags: <defaults>
</compile_context>

<pallas_src>
import math
from functools import partial

import jax
import jax.numpy as jnp
from jax.experimental import pallas as pl
from jax.experimental.pallas import tpu as pltpu

# ----------------------- config (cf) -----------------------
D_MODEL = 32
N_HEAD = 4
D_HEAD = D_MODEL // N_HEAD
D_FF = 64
N_LAYER = 2
VOCAB = 50
VOCAB_PAD = 64          # embedding table padded to a nicer contraction size
PAD_IDX = 0
EPS = 1e-6
MAX_LEN = 64
B = 2
S = 8
BS = B * S              # 16
HS = N_HEAD * S         # 32 rows per batch in the packed-head layout
BHS = B * HS            # 64 packed (batch, head, query) rows


# ----------------------- fused Pallas kernel -----------------------
def encoder_fused_kernel(tok_ref, emb_ref, pe_ref, amask_ref, hmask_ref, fold_ref,
                         ln_g_ref, ln_b_ref, wqkv_ref, bqkv_ref, wo_ref, bo_ref,
                         w1_ref, b1_ref, w2_ref, b2_ref, fg_ref, fb_ref,
                         o_ref, *, ln_eps, final_eps):
    """Entire encoder forward for the whole (B*S, D) activation block in one kernel step."""

    # ---- embedding (one-hot matmul; table pre-scaled by sqrt(d_model)) + positional encoding ----
    tok = tok_ref[...]                                                     # (BS, 1) int32
    vocab_iota = jax.lax.broadcasted_iota(jnp.int32, (BS, VOCAB_PAD), 1)
    onehot = (tok == vocab_iota).astype(jnp.float32)                       # (BS, VOCAB_PAD)
    x = jnp.dot(onehot, emb_ref[...], preferred_element_type=jnp.float32) + pe_ref[...]
    # Dropout: inference-mode identity.

    amask = amask_ref[...]    # (BHS, BS)  additive 0/-1e9 key + cross-batch mask
    hmask = hmask_ref[...]    # (BHS, D)   constant 0/1 block-diagonal head mask
    fold = fold_ref[...]      # (BS, BHS)  constant fold matrix (sums the per-head rows)

    def layer_norm(v, g, b, eps, clamp=False):
        mu = jnp.mean(v, axis=-1, keepdims=True)
        ms = jnp.mean(v * v, axis=-1, keepdims=True)      # independent second reduce (E[x^2])
        var = ms - mu * mu
        if clamp:                                         # guard tiny-eps LN against cancellation
            var = jnp.maximum(var, 0.0)
        return (v - mu) * jax.lax.rsqrt(var + eps) * g + b

    for l in range(N_LAYER):                              # static unroll, L=2
        g = ln_g_ref[l]                                   # (1, D) — shared LN, eps=d_model (ref bug)
        bln = ln_b_ref[l]

        # ---- multi-head self attention (block-diagonal packed) ----
        xn = layer_norm(x, g, bln, ln_eps)
        # fused Q/K/V projection: one (BS, D) @ (D, 3D) matmul; Q weights carry 1/sqrt(d_head)
        qkv = jnp.dot(xn, wqkv_ref[l], preferred_element_type=jnp.float32) + bqkv_ref[l]
        q = qkv[:, 0:D_MODEL]                             # (BS, D), already scaled
        k = qkv[:, D_MODEL:2 * D_MODEL]                   # (BS, D)
        v = qkv[:, 2 * D_MODEL:3 * D_MODEL]               # (BS, D)

        # replicate each batch's queries once per head, keep only that head's columns
        q_parts = []
        for bidx in range(B):                             # static unroll, B=2
            q_parts += [q[bidx * S:(bidx + 1) * S, :]] * N_HEAD
        q_bd = jnp.concatenate(q_parts, axis=0) * hmask   # (BHS, D) packed block-diagonal Q

        # scores for every (batch, head, query) row against every key in ONE matmul
        s = jax.lax.dot_general(q_bd, k, (((1,), (1,)), ((), ())),
                                preferred_element_type=jnp.float32) + amask   # (BHS, BS)

        # softmax batched over all rows; masked / cross-batch lanes underflow to exactly 0
        m = jnp.max(s, axis=-1, keepdims=True)
        e = jnp.exp(s - m)
        p = e * pl.reciprocal(jnp.sum(e, axis=-1, keepdims=True), approx=True)

        # context for every head in ONE matmul, then fold the head rows back to (BS, D)
        full = jnp.dot(p, v, preferred_element_type=jnp.float32) * hmask      # (BHS, D)
        ctx = jnp.dot(fold, full, preferred_element_type=jnp.float32)         # (BS, D)

        attn = jnp.dot(ctx, wo_ref[l], preferred_element_type=jnp.float32) + bo_ref[l]
        x = x + attn                                                           # residual 1

        # ---- position-wise feed forward ----
        xn2 = layer_norm(x, g, bln, ln_eps)
        hdn = jnp.maximum(
            jnp.dot(xn2, w1_ref[l], preferred_element_type=jnp.float32) + b1_ref[l], 0.0)
        x = x + jnp.dot(hdn, w2_ref[l], preferred_element_type=jnp.float32) + b2_ref[l]  # residual 2

    # ---- final encoder LayerNorm (eps = cf.eps) ----
    y = layer_norm(x, fg_ref[...], fb_ref[...], final_eps, clamp=True)
    o_ref[...] = y.astype(o_ref.dtype)                    # single lane-dense (BS, D) store


# ----------------------- wrapper -----------------------
@jax.jit
def encoder_forward(tokens, params):
    # create_source_mask: (tokens != pad) -> additive 0 / -1e9 key bias; cross-batch lanes -1e9
    key_bias = jnp.where(tokens != PAD_IDX, 0.0, -1e9).astype(jnp.float32)            # (B, S)
    cross = jnp.where(jnp.eye(B, dtype=bool)[:, :, None], key_bias[None, :, :], -1e9)  # (B, B, S)
    attn_mask = jnp.repeat(cross.reshape(B, B * S), HS, axis=0)                        # (BHS, BS)
    tok2 = tokens.reshape(BS, 1).astype(jnp.int32)

    kernel = partial(encoder_fused_kernel, ln_eps=float(D_MODEL), final_eps=EPS)
    vmem = pl.BlockSpec(memory_space=pltpu.MemorySpace.VMEM)
    operands = (tok2, params["emb_pad"], params["pe_tiled"], attn_mask,
                params["head_mask"], params["fold"],
                params["ln_g"], params["ln_b"], params["wqkv"], params["bqkv"],
                params["wo"], params["bo"], params["w1"], params["b1"],
                params["w2"], params["b2"], params["norm_g"], params["norm_b"])
    y = pl.pallas_call(
        kernel,
        out_shape=jax.ShapeDtypeStruct((BS, D_MODEL), jnp.float32),
        in_specs=[vmem] * len(operands),
        out_specs=vmem,
        # no grid: whole problem (~120 KB of weights/constants + ~20 KB activations) fits VMEM
    )(*operands)
    return y.reshape(B, S, D_MODEL)


# ----------------------- params (plain JAX, one-time) -----------------------
def sinusoidal_pe(max_len, d_model):
    pos = jnp.arange(max_len, dtype=jnp.float32)[:, None]
    div = jnp.exp(jnp.arange(0, d_model, 2, dtype=jnp.float32) * (-math.log(10000.0) / d_model))
    pe = jnp.zeros((max_len, d_model), jnp.float32)
    pe = pe.at[:, 0::2].set(jnp.sin(pos * div))
    pe = pe.at[:, 1::2].set(jnp.cos(pos * div))
    return pe


def init_params(key):
    keys = jax.random.split(key, 1 + N_LAYER)
    emb = jax.random.normal(keys[0], (VOCAB, D_MODEL), jnp.float32) * 0.02
    emb = emb.at[PAD_IDX].set(0.0)                        # nn.Embedding(padding_idx=PAD_IDX)
    emb_pad = jnp.zeros((VOCAB_PAD, D_MODEL), jnp.float32).at[:VOCAB].set(emb)
    emb_pad = emb_pad * math.sqrt(D_MODEL)                # fold sqrt(d_model) into the table

    def lin(k, din, dout):
        return jax.random.normal(k, (din, dout), jnp.float32) * 0.02

    inv_scale = 1.0 / math.sqrt(D_HEAD)
    ln_g, ln_b, wqkv, bqkv, wo, bo, w1, b1, w2, b2 = ([] for _ in range(10))
    for i in range(N_LAYER):
        lk = jax.random.split(keys[1 + i], 6)
        ln_g.append(jnp.ones((1, D_MODEL), jnp.float32))
        ln_b.append(jnp.zeros((1, D_MODEL), jnp.float32))
        # fused QKV weight (D, 3D); 1/sqrt(d_head) folded into the Q columns
        wq = lin(lk[0], D_MODEL, D_MODEL) * inv_scale
        wk = lin(lk[1], D_MODEL, D_MODEL)
        wv = lin(lk[2], D_MODEL, D_MODEL)
        wqkv.append(jnp.concatenate([wq, wk, wv], axis=1))
        bqkv.append(jnp.zeros((1, 3 * D_MODEL), jnp.float32))   # (Q bias would also carry inv_scale)
        wo.append(lin(lk[3], D_MODEL, D_MODEL))
        bo.append(jnp.zeros((1, D_MODEL), jnp.float32))
        w1.append(lin(lk[4], D_MODEL, D_FF))
        b1.append(jnp.zeros((1, D_FF), jnp.float32))
        w2.append(lin(lk[5], D_FF, D_MODEL))
        b2.append(jnp.zeros((1, D_MODEL), jnp.float32))

    stack = lambda xs: jnp.stack(xs, axis=0)
    pe = sinusoidal_pe(MAX_LEN, D_MODEL)

    # constant 0/1 block-diagonal head mask (BHS, D): row b*HS + h*S + q keeps head-h columns
    r = jnp.arange(HS)[:, None]
    c = jnp.arange(D_MODEL)[None, :]
    head_mask = jnp.tile(((c // D_HEAD) == (r // S)).astype(jnp.float32), (B, 1))   # (BHS, D)

    # constant fold matrix (BS, BHS): sums the per-head context rows back to their (b, q) row
    rr = jnp.arange(BS)[:, None]
    cc = jnp.arange(BHS)[None, :]
    fold = (((cc // HS) == (rr // S)) & ((cc % S) == (rr % S))).astype(jnp.float32)  # (BS, BHS)

    return dict(
        emb_pad=emb_pad,
        pe_tiled=jnp.tile(pe[:S], (B, 1)),            # (B*S, D), PE broadcast over batch
        head_mask=head_mask, fold=fold,
        ln_g=stack(ln_g), ln_b=stack(ln_b),
        wqkv=stack(wqkv), bqkv=stack(bqkv),
        wo=stack(wo), bo=stack(bo),
        w1=stack(w1), b1=stack(b1),
        w2=stack(w2), b2=stack(b2),
        norm_g=jnp.ones((1, D_MODEL), jnp.float32),
        norm_b=jnp.zeros((1, D_MODEL), jnp.float32),
    )


if __name__ == "__main__":
    key = jax.random.PRNGKey(0)
    k_tok, k_par = jax.random.split(key)
    tokens = jax.random.randint(k_tok, (B, S), 1, VOCAB)
    tokens = tokens.at[0, 6:].set(PAD_IDX)   # exercise the source mask
    tokens = tokens.at[1, 5:].set(PAD_IDX)

    params = init_params(k_par)
    out = jax.block_until_ready(encoder_forward(tokens, params))
    assert out.shape == (B, S, D_MODEL) and bool(jnp.all(jnp.isfinite(out)))
    print("KERNEL_OK")
</pallas_src>

<mosaic_0001>
module attributes {stable_mosaic.version = 11 : i64} {
  func.func @encoder_fused_kernel(%arg0: memref<16x1xi32, #tpu.memory_space<vmem>>, %arg1: memref<64x32xf32, #tpu.memory_space<vmem>>, %arg2: memref<16x32xf32, #tpu.memory_space<vmem>>, %arg3: memref<64x16xf32, #tpu.memory_space<vmem>>, %arg4: memref<64x32xf32, #tpu.memory_space<vmem>>, %arg5: memref<16x64xf32, #tpu.memory_space<vmem>>, %arg6: memref<2x1x32xf32, #tpu.memory_space<vmem>>, %arg7: memref<2x1x32xf32, #tpu.memory_space<vmem>>, %arg8: memref<2x32x96xf32, #tpu.memory_space<vmem>>, %arg9: memref<2x1x96xf32, #tpu.memory_space<vmem>>, %arg10: memref<2x32x32xf32, #tpu.memory_space<vmem>>, %arg11: memref<2x1x32xf32, #tpu.memory_space<vmem>>, %arg12: memref<2x32x64xf32, #tpu.memory_space<vmem>>, %arg13: memref<2x1x64xf32, #tpu.memory_space<vmem>>, %arg14: memref<2x64x32xf32, #tpu.memory_space<vmem>>, %arg15: memref<2x1x32xf32, #tpu.memory_space<vmem>>, %arg16: memref<1x32xf32, #tpu.memory_space<vmem>>, %arg17: memref<1x32xf32, #tpu.memory_space<vmem>>, %arg18: memref<16x32xf32, #tpu.memory_space<vmem>>) attributes {dimension_semantics = [], scalar_prefetch = 0 : i64, scratch_operands = 0 : i64, tpu.core_type = #tpu.core_type<tc>} {
    %c0 = arith.constant 0 : index
    %c0_0 = arith.constant 0 : index
    %0 = vector.load %arg0[%c0, %c0_0] : memref<16x1xi32, #tpu.memory_space<vmem>>, vector<16x1xi32>
    %1 = tpu.iota {dimensions = array<i32: 1>} : vector<16x64xi32>
    %2 = vector.broadcast %0 : vector<16x1xi32> to vector<16x64xi32>
    %3 = arith.cmpi eq, %2, %1 : vector<16x64xi32>
    %4 = arith.extui %3 : vector<16x64xi1> to vector<16x64xi32>
    %5 = arith.sitofp %4 : vector<16x64xi32> to vector<16x64xf32>
    %c0_1 = arith.constant 0 : index
    %c0_2 = arith.constant 0 : index
    %6 = vector.load %arg1[%c0_1, %c0_2] : memref<64x32xf32, #tpu.memory_space<vmem>>, vector<64x32xf32>
    %cst = arith.constant dense<0.000000e+00> : vector<16x32xf32>
    %7 = tpu.matmul %5, %6, %cst {dimension_numbers = #tpu.dot_dimension_numbers<[1], [0], [0], [1], [0, 0, 1, 1], [], []>} : vector<16x64xf32>, vector<64x32xf32>, vector<16x32xf32> -> vector<16x32xf32>
    %c0_3 = arith.constant 0 : index
    %c0_4 = arith.constant 0 : index
    %8 = vector.load %arg2[%c0_3, %c0_4] : memref<16x32xf32, #tpu.memory_space<vmem>>, vector<16x32xf32>
    %9 = arith.addf %7, %8 : vector<16x32xf32>
    %c0_5 = arith.constant 0 : index
    %c0_6 = arith.constant 0 : index
    %10 = vector.load %arg3[%c0_5, %c0_6] : memref<64x16xf32, #tpu.memory_space<vmem>>, vector<64x16xf32>
    %c0_7 = arith.constant 0 : index
    %c0_8 = arith.constant 0 : index
    %11 = vector.load %arg4[%c0_7, %c0_8] : memref<64x32xf32, #tpu.memory_space<vmem>>, vector<64x32xf32>
    %c0_9 = arith.constant 0 : index
    %c0_10 = arith.constant 0 : index
    %12 = vector.load %arg5[%c0_9, %c0_10] : memref<16x64xf32, #tpu.memory_space<vmem>>, vector<16x64xf32>
    %c0_11 = arith.constant 0 : index
    %c0_12 = arith.constant 0 : index
    %c0_13 = arith.constant 0 : index
    %13 = vector.load %arg6[%c0_11, %c0_12, %c0_13] : memref<2x1x32xf32, #tpu.memory_space<vmem>>, vector<1x1x32xf32>
    %14 = vector.shape_cast %13 : vector<1x1x32xf32> to vector<1x32xf32>
    %c0_14 = arith.constant 0 : index
    %c0_15 = arith.constant 0 : index
    %c0_16 = arith.constant 0 : index
    %15 = vector.load %arg7[%c0_14, %c0_15, %c0_16] : memref<2x1x32xf32, #tpu.memory_space<vmem>>, vector<1x1x32xf32>
    %16 = vector.shape_cast %15 : vector<1x1x32xf32> to vector<1x32xf32>
    %cst_17 = arith.constant dense<0.000000e+00> : vector<16xf32>
    %17 = vector.multi_reduction <add>, %9, %cst_17 [1] : vector<16x32xf32> to vector<16xf32>
    %18 = vector.shape_cast %17 : vector<16xf32> to vector<16x1xf32>
    %cst_18 = arith.constant 3.200000e+01 : f32
    %19 = vector.broadcast %cst_18 : f32 to vector<16x1xf32>
    %20 = arith.divf %18, %19 : vector<16x1xf32>
    %21 = arith.mulf %9, %9 : vector<16x32xf32>
    %cst_19 = arith.constant dense<0.000000e+00> : vector<16xf32>
    %22 = vector.multi_reduction <add>, %21, %cst_19 [1] : vector<16x32xf32> to vector<16xf32>
    %23 = vector.shape_cast %22 : vector<16xf32> to vector<16x1xf32>
    %cst_20 = arith.constant 3.200000e+01 : f32
    %24 = vector.broadcast %cst_20 : f32 to vector<16x1xf32>
    %25 = arith.divf %23, %24 : vector<16x1xf32>
    %26 = arith.mulf %20, %20 : vector<16x1xf32>
    %27 = arith.subf %25, %26 : vector<16x1xf32>
    %28 = vector.broadcast %20 : vector<16x1xf32> to vector<16x32xf32>
    %29 = arith.subf %9, %28 : vector<16x32xf32>
    %cst_21 = arith.constant 3.200000e+01 : f32
    %30 = vector.broadcast %cst_21 : f32 to vector<16x1xf32>
    %31 = arith.addf %27, %30 : vector<16x1xf32>
    %32 = math.rsqrt %31 : vector<16x1xf32>
    %33 = vector.broadcast %32 : vector<16x1xf32> to vector<16x32xf32>
    %34 = arith.mulf %29, %33 : vector<16x32xf32>
    %35 = vector.broadcast %14 : vector<1x32xf32> to vector<16x32xf32>
    %36 = arith.mulf %34, %35 : vector<16x32xf32>
    %37 = vector.broadcast %16 : vector<1x32xf32> to vector<16x32xf32>
    %38 = arith.addf %36, %37 : vector<16x32xf32>
    %c0_22 = arith.constant 0 : index
    %c0_23 = arith.constant 0 : index
    %c0_24 = arith.constant 0 : index
    %39 = vector.load %arg8[%c0_22, %c0_23, %c0_24] : memref<2x32x96xf32, #tpu.memory_space<vmem>>, vector<1x32x96xf32>
    %40 = vector.shape_cast %39 : vector<1x32x96xf32> to vector<32x96xf32>
    %cst_25 = arith.constant dense<0.000000e+00> : vector<16x96xf32>
    %41 = tpu.matmul %38, %40, %cst_25 {dimension_numbers = #tpu.dot_dimension_numbers<[1], [0], [0], [1], [0, 0, 1, 1], [], []>} : vector<16x32xf32>, vector<32x96xf32>, vector<16x96xf32> -> vector<16x96xf32>
    %c0_26 = arith.constant 0 : index
    %c0_27 = arith.constant 0 : index
    %c0_28 = arith.constant 0 : index
    %42 = vector.load %arg9[%c0_26, %c0_27, %c0_28] : memref<2x1x96xf32, #tpu.memory_space<vmem>>, vector<1x1x96xf32>
    %43 = vector.shape_cast %42 : vector<1x1x96xf32> to vector<1x96xf32>
    %44 = vector.broadcast %43 : vector<1x96xf32> to vector<16x96xf32>
    %45 = arith.addf %41, %44 : vector<16x96xf32>
    %46 = vector.extract_strided_slice %45 {offsets = [0, 0], sizes = [16, 32], strides = [1, 1]} : vector<16x96xf32> to vector<16x32xf32>
    %47 = vector.extract_strided_slice %45 {offsets = [0, 32], sizes = [16, 32], strides = [1, 1]} : vector<16x96xf32> to vector<16x32xf32>
    %48 = vector.extract_strided_slice %45 {offsets = [0, 64], sizes = [16, 32], strides = [1, 1]} : vector<16x96xf32> to vector<16x32xf32>
    %49 = vector.extract_strided_slice %46 {offsets = [0, 0], sizes = [8, 32], strides = [1, 1]} : vector<16x32xf32> to vector<8x32xf32>
    %50 = vector.extract_strided_slice %46 {offsets = [8, 0], sizes = [8, 32], strides = [1, 1]} : vector<16x32xf32> to vector<8x32xf32>
    %51 = tpu.concatenate %49, %49, %49, %49, %50, %50, %50, %50 in 0 : vector<8x32xf32>, vector<8x32xf32>, vector<8x32xf32>, vector<8x32xf32>, vector<8x32xf32>, vector<8x32xf32>, vector<8x32xf32>, vector<8x32xf32> -> vector<64x32xf32>
    %52 = arith.mulf %51, %11 : vector<64x32xf32>
    %cst_29 = arith.constant dense<0.000000e+00> : vector<64x16xf32>
    %53 = tpu.matmul %52, %47, %cst_29 {dimension_numbers = #tpu.dot_dimension_numbers<[1], [1], [0], [0], [0, 0, 1, 0], [], []>} : vector<64x32xf32>, vector<16x32xf32>, vector<64x16xf32> -> vector<64x16xf32>
    %54 = arith.addf %53, %10 : vector<64x16xf32>
    %cst_30 = arith.constant dense<0xFF800000> : vector<64xf32>
    %55 = vector.multi_reduction <maximumf>, %54, %cst_30 [1] : vector<64x16xf32> to vector<64xf32>
    %56 = vector.shape_cast %55 : vector<64xf32> to vector<64x1xf32>
    %57 = vector.broadcast %56 : vector<64x1xf32> to vector<64x16xf32>
    %58 = arith.subf %54, %57 : vector<64x16xf32>
    %59 = math.exp %58 : vector<64x16xf32>
    %cst_31 = arith.constant dense<0.000000e+00> : vector<64xf32>
    %60 = vector.multi_reduction <add>, %59, %cst_31 [1] : vector<64x16xf32> to vector<64xf32>
    %61 = vector.shape_cast %60 : vector<64xf32> to vector<64x1xf32>
    %62 = tpu.reciprocal %61 {approx = true} : vector<64x1xf32> -> vector<64x1xf32>
    %63 = vector.broadcast %62 : vector<64x1xf32> to vector<64x16xf32>
    %64 = arith.mulf %59, %63 : vector<64x16xf32>
    %cst_32 = arith.constant dense<0.000000e+00> : vector<64x32xf32>
    %65 = tpu.matmul %64, %48, %cst_32 {dimension_numbers = #tpu.dot_dimension_numbers<[1], [0], [0], [1], [0, 0, 1, 1], [], []>} : vector<64x16xf32>, vector<16x32xf32>, vector<64x32xf32> -> vector<64x32xf32>
    %66 = arith.mulf %65, %11 : vector<64x32xf32>
    %cst_33 = arith.constant dense<0.000000e+00> : vector<16x32xf32>
    %67 = tpu.matmul %12, %66, %cst_33 {dimension_numbers = #tpu.dot_dimension_numbers<[1], [0], [0], [1], [0, 0, 1, 1], [], []>} : vector<16x64xf32>, vector<64x32xf32>, vector<16x32xf32> -> vector<16x32xf32>
    %c0_34 = arith.constant 0 : index
    %c0_35 = arith.constant 0 : index
    %c0_36 = arith.constant 0 : index
    %68 = vector.load %arg10[%c0_34, %c0_35, %c0_36] : memref<2x32x32xf32, #tpu.memory_space<vmem>>, vector<1x32x32xf32>
    %69 = vector.shape_cast %68 : vector<1x32x32xf32> to vector<32x32xf32>
    %cst_37 = arith.constant dense<0.000000e+00> : vector<16x32xf32>
    %70 = tpu.matmul %67, %69, %cst_37 {dimension_numbers = #tpu.dot_dimension_numbers<[1], [0], [0], [1], [0, 0, 1, 1], [], []>} : vector<16x32xf32>, vector<32x32xf32>, vector<16x32xf32> -> vector<16x32xf32>
    %c0_38 = arith.constant 0 : index
    %c0_39 = arith.constant 0 : index
    %c0_40 = arith.constant 0 : index
    %71 = vector.load %arg11[%c0_38, %c0_39, %c0_40] : memref<2x1x32xf32, #tpu.memory_space<vmem>>, vector<1x1x32xf32>
    %72 = vector.shape_cast %71 : vector<1x1x32xf32> to vector<1x32xf32>
    %73 = vector.broadcast %72 : vector<1x32xf32> to vector<16x32xf32>
    %74 = arith.addf %70, %73 : vector<16x32xf32>
    %75 = arith.addf %9, %74 : vector<16x32xf32>
    %cst_41 = arith.constant dense<0.000000e+00> : vector<16xf32>
    %76 = vector.multi_reduction <add>, %75, %cst_41 [1] : vector<16x32xf32> to vector<16xf32>
    %77 = vector.shape_cast %76 : vector<16xf32> to vector<16x1xf32>
    %cst_42 = arith.constant 3.200000e+01 : f32
    %78 = vector.broadcast %cst_42 : f32 to vector<16x1xf32>
    %79 = arith.divf %77, %78 : vector<16x1xf32>
    %80 = arith.mulf %75, %75 : vector<16x32xf32>
    %cst_43 = arith.constant dense<0.000000e+00> : vector<16xf32>
    %81 = vector.multi_reduction <add>, %80, %cst_43 [1] : vector<16x32xf32> to vector<16xf32>
    %82 = vector.shape_cast %81 : vector<16xf32> to vector<16x1xf32>
    %cst_44 = arith.constant 3.200000e+01 : f32
    %83 = vector.broadcast %cst_44 : f32 to vector<16x1xf32>
    %84 = arith.divf %82, %83 : vector<16x1xf32>
    %85 = arith.mulf %79, %79 : vector<16x1xf32>
    %86 = arith.subf %84, %85 : vector<16x1xf32>
    %87 = vector.broadcast %79 : vector<16x1xf32> to vector<16x32xf32>
    %88 = arith.subf %75, %87 : vector<16x32xf32>
    %cst_45 = arith.constant 3.200000e+01 : f32
    %89 = vector.broadcast %cst_45 : f32 to vector<16x1xf32>
    %90 = arith.addf %86, %89 : vector<16x1xf32>
    %91 = math.rsqrt %90 : vector<16x1xf32>
    %92 = vector.broadcast %91 : vector<16x1xf32> to vector<16x32xf32>
    %93 = arith.mulf %88, %92 : vector<16x32xf32>
    %94 = vector.broadcast %14 : vector<1x32xf32> to vector<16x32xf32>
    %95 = arith.mulf %93, %94 : vector<16x32xf32>
    %96 = vector.broadcast %16 : vector<1x32xf32> to vector<16x32xf32>
    %97 = arith.addf %95, %96 : vector<16x32xf32>
    %c0_46 = arith.constant 0 : index
    %c0_47 = arith.constant 0 : index
    %c0_48 = arith.constant 0 : index
    %98 = vector.load %arg12[%c0_46, %c0_47, %c0_48] : memref<2x32x64xf32, #tpu.memory_space<vmem>>, vector<1x32x64xf32>
    %99 = vector.shape_cast %98 : vector<1x32x64xf32> to vector<32x64xf32>
    %cst_49 = arith.constant dense<0.000000e+00> : vector<16x64xf32>
    %100 = tpu.matmul %97, %99, %cst_49 {dimension_numbers = #tpu.dot_dimension_numbers<[1], [0], [0], [1], [0, 0, 1, 1], [], []>} : vector<16x32xf32>, vector<32x64xf32>, vector<16x64xf32> -> vector<16x64xf32>
    %c0_50 = arith.constant 0 : index
    %c0_51 = arith.constant 0 : index
    %c0_52 = arith.constant 0 : index
    %101 = vector.load %arg13[%c0_50, %c0_51, %c0_52] : memref<2x1x64xf32, #tpu.memory_space<vmem>>, vector<1x1x64xf32>
    %102 = vector.shape_cast %101 : vector<1x1x64xf32> to vector<1x64xf32>
    %103 = vector.broadcast %102 : vector<1x64xf32> to vector<16x64xf32>
    %104 = arith.addf %100, %103 : vector<16x64xf32>
    %cst_53 = arith.constant 0.000000e+00 : f32
    %105 = vector.broadcast %cst_53 : f32 to vector<16x64xf32>
    %106 = arith.maximumf %104, %105 : vector<16x64xf32>
    %c0_54 = arith.constant 0 : index
    %c0_55 = arith.constant 0 : index
    %c0_56 = arith.constant 0 : index
    %107 = vector.load %arg14[%c0_54, %c0_55, %c0_56] : memref<2x64x32xf32, #tpu.memory_space<vmem>>, vector<1x64x32xf32>
    %108 = vector.shape_cast %107 : vector<1x64x32xf32> to vector<64x32xf32>
    %cst_57 = arith.constant dense<0.000000e+00> : vector<16x32xf32>
    %109 = tpu.matmul %106, %108, %cst_57 {dimension_numbers = #tpu.dot_dimension_numbers<[1], [0], [0], [1], [0, 0, 1, 1], [], []>} : vector<16x64xf32>, vector<64x32xf32>, vector<16x32xf32> -> vector<16x32xf32>
    %110 = arith.addf %75, %109 : vector<16x32xf32>
    %c0_58 = arith.constant 0 : index
    %c0_59 = arith.constant 0 : index
    %c0_60 = arith.constant 0 : index
    %111 = vector.load %arg15[%c0_58, %c0_59, %c0_60] : memref<2x1x32xf32, #tpu.memory_space<vmem>>, vector<1x1x32xf32>
    %112 = vector.shape_cast %111 : vector<1x1x32xf32> to vector<1x32xf32>
    %113 = vector.broadcast %112 : vector<1x32xf32> to vector<16x32xf32>
    %114 = arith.addf %110, %113 : vector<16x32xf32>
    %c1 = arith.constant 1 : index
    %c0_61 = arith.constant 0 : index
    %c0_62 = arith.constant 0 : index
    %115 = vector.load %arg6[%c1, %c0_61, %c0_62] : memref<2x1x32xf32, #tpu.memory_space<vmem>>, vector<1x1x32xf32>
    %116 = vector.shape_cast %115 : vector<1x1x32xf32> to vector<1x32xf32>
    %c1_63 = arith.constant 1 : index
    %c0_64 = arith.constant 0 : index
    %c0_65 = arith.constant 0 : index
    %117 = vector.load %arg7[%c1_63, %c0_64, %c0_65] : memref<2x1x32xf32, #tpu.memory_space<vmem>>, vector<1x1x32xf32>
    %118 = vector.shape_cast %117 : vector<1x1x32xf32> to vector<1x32xf32>
    %cst_66 = arith.constant dense<0.000000e+00> : vector<16xf32>
    %119 = vector.multi_reduction <add>, %114, %cst_66 [1] : vector<16x32xf32> to vector<16xf32>
    %120 = vector.shape_cast %119 : vector<16xf32> to vector<16x1xf32>
    %cst_67 = arith.constant 3.200000e+01 : f32
    %121 = vector.broadcast %cst_67 : f32 to vector<16x1xf32>
    %122 = arith.divf %120, %121 : vector<16x1xf32>
    %123 = arith.mulf %114, %114 : vector<16x32xf32>
    %cst_68 = arith.constant dense<0.000000e+00> : vector<16xf32>
    %124 = vector.multi_reduction <add>, %123, %cst_68 [1] : vector<16x32xf32> to vector<16xf32>
    %125 = vector.shape_cast %124 : vector<16xf32> to vector<16x1xf32>
    %cst_69 = arith.constant 3.200000e+01 : f32
    %126 = vector.broadcast %cst_69 : f32 to vector<16x1xf32>
    %127 = arith.divf %125, %126 : vector<16x1xf32>
    %128 = arith.mulf %122, %122 : vector<16x1xf32>
    %129 = arith.subf %127, %128 : vector<16x1xf32>
    %130 = vector.broadcast %122 : vector<16x1xf32> to vector<16x32xf32>
    %131 = arith.subf %114, %130 : vector<16x32xf32>
    %cst_70 = arith.constant 3.200000e+01 : f32
    %132 = vector.broadcast %cst_70 : f32 to vector<16x1xf32>
    %133 = arith.addf %129, %132 : vector<16x1xf32>
    %134 = math.rsqrt %133 : vector<16x1xf32>
    %135 = vector.broadcast %134 : vector<16x1xf32> to vector<16x32xf32>
    %136 = arith.mulf %131, %135 : vector<16x32xf32>
    %137 = vector.broadcast %116 : vector<1x32xf32> to vector<16x32xf32>
    %138 = arith.mulf %136, %137 : vector<16x32xf32>
    %139 = vector.broadcast %118 : vector<1x32xf32> to vector<16x32xf32>
    %140 = arith.addf %138, %139 : vector<16x32xf32>
    %c1_71 = arith.constant 1 : index
    %c0_72 = arith.constant 0 : index
    %c0_73 = arith.constant 0 : index
    %141 = vector.load %arg8[%c1_71, %c0_72, %c0_73] : memref<2x32x96xf32, #tpu.memory_space<vmem>>, vector<1x32x96xf32>
    %142 = vector.shape_cast %141 : vector<1x32x96xf32> to vector<32x96xf32>
    %cst_74 = arith.constant dense<0.000000e+00> : vector<16x96xf32>
    %143 = tpu.matmul %140, %142, %cst_74 {dimension_numbers = #tpu.dot_dimension_numbers<[1], [0], [0], [1], [0, 0, 1, 1], [], []>} : vector<16x32xf32>, vector<32x96xf32>, vector<16x96xf32> -> vector<16x96xf32>
    %c1_75 = arith.constant 1 : index
    %c0_76 = arith.constant 0 : index
    %c0_77 = arith.constant 0 : index
    %144 = vector.load %arg9[%c1_75, %c0_76, %c0_77] : memref<2x1x96xf32, #tpu.memory_space<vmem>>, vector<1x1x96xf32>
    %145 = vector.shape_cast %144 : vector<1x1x96xf32> to vector<1x96xf32>
    %146 = vector.broadcast %145 : vector<1x96xf32> to vector<16x96xf32>
    %147 = arith.addf %143, %146 : vector<16x96xf32>
    %148 = vector.extract_strided_slice %147 {offsets = [0, 0], sizes = [16, 32], strides = [1, 1]} : vector<16x96xf32> to vector<16x32xf32>
    %149 = vector.extract_strided_slice %147 {offsets = [0, 32], sizes = [16, 32], strides = [1, 1]} : vector<16x96xf32> to vector<16x32xf32>
    %150 = vector.extract_strided_slice %147 {offsets = [0, 64], sizes = [16, 32], strides = [1, 1]} : vector<16x96xf32> to vector<16x32xf32>
    %151 = vector.extract_strided_slice %148 {offsets = [0, 0], sizes = [8, 32], strides = [1, 1]} : vector<16x32xf32> to vector<8x32xf32>
    %152 = vector.extract_strided_slice %148 {offsets = [8, 0], sizes = [8, 32], strides = [1, 1]} : vector<16x32xf32> to vector<8x32xf32>
    %153 = tpu.concatenate %151, %151, %151, %151, %152, %152, %152, %152 in 0 : vector<8x32xf32>, vector<8x32xf32>, vector<8x32xf32>, vector<8x32xf32>, vector<8x32xf32>, vector<8x32xf32>, vector<8x32xf32>, vector<8x32xf32> -> vector<64x32xf32>
    %154 = arith.mulf %153, %11 : vector<64x32xf32>
    %cst_78 = arith.constant dense<0.000000e+00> : vector<64x16xf32>
    %155 = tpu.matmul %154, %149, %cst_78 {dimension_numbers = #tpu.dot_dimension_numbers<[1], [1], [0], [0], [0, 0, 1, 0], [], []>} : vector<64x32xf32>, vector<16x32xf32>, vector<64x16xf32> -> vector<64x16xf32>
    %156 = arith.addf %155, %10 : vector<64x16xf32>
    %cst_79 = arith.constant dense<0xFF800000> : vector<64xf32>
    %157 = vector.multi_reduction <maximumf>, %156, %cst_79 [1] : vector<64x16xf32> to vector<64xf32>
    %158 = vector.shape_cast %157 : vector<64xf32> to vector<64x1xf32>
    %159 = vector.broadcast %158 : vector<64x1xf32> to vector<64x16xf32>
    %160 = arith.subf %156, %159 : vector<64x16xf32>
    %161 = math.exp %160 : vector<64x16xf32>
    %cst_80 = arith.constant dense<0.000000e+00> : vector<64xf32>
    %162 = vector.multi_reduction <add>, %161, %cst_80 [1] : vector<64x16xf32> to vector<64xf32>
    %163 = vector.shape_cast %162 : vector<64xf32> to vector<64x1xf32>
    %164 = tpu.reciprocal %163 {approx = true} : vector<64x1xf32> -> vector<64x1xf32>
    %165 = vector.broadcast %164 : vector<64x1xf32> to vector<64x16xf32>
    %166 = arith.mulf %161, %165 : vector<64x16xf32>
    %cst_81 = arith.constant dense<0.000000e+00> : vector<64x32xf32>
    %167 = tpu.matmul %166, %150, %cst_81 {dimension_numbers = #tpu.dot_dimension_numbers<[1], [0], [0], [1], [0, 0, 1, 1], [], []>} : vector<64x16xf32>, vector<16x32xf32>, vector<64x32xf32> -> vector<64x32xf32>
    %168 = arith.mulf %167, %11 : vector<64x32xf32>
    %cst_82 = arith.constant dense<0.000000e+00> : vector<16x32xf32>
    %169 = tpu.matmul %12, %168, %cst_82 {dimension_numbers = #tpu.dot_dimension_numbers<[1], [0], [0], [1], [0, 0, 1, 1], [], []>} : vector<16x64xf32>, vector<64x32xf32>, vector<16x32xf32> -> vector<16x32xf32>
    %c1_83 = arith.constant 1 : index
    %c0_84 = arith.constant 0 : index
    %c0_85 = arith.constant 0 : index
    %170 = vector.load %arg10[%c1_83, %c0_84, %c0_85] : memref<2x32x32xf32, #tpu.memory_space<vmem>>, vector<1x32x32xf32>
    %171 = vector.shape_cast %170 : vector<1x32x32xf32> to vector<32x32xf32>
    %cst_86 = arith.constant dense<0.000000e+00> : vector<16x32xf32>
    %172 = tpu.matmul %169, %171, %cst_86 {dimension_numbers = #tpu.dot_dimension_numbers<[1], [0], [0], [1], [0, 0, 1, 1], [], []>} : vector<16x32xf32>, vector<32x32xf32>, vector<16x32xf32> -> vector<16x32xf32>
    %c1_87 = arith.constant 1 : index
    %c0_88 = arith.constant 0 : index
    %c0_89 = arith.constant 0 : index
    %173 = vector.load %arg11[%c1_87, %c0_88, %c0_89] : memref<2x1x32xf32, #tpu.memory_space<vmem>>, vector<1x1x32xf32>
    %174 = vector.shape_cast %173 : vector<1x1x32xf32> to vector<1x32xf32>
    %175 = vector.broadcast %174 : vector<1x32xf32> to vector<16x32xf32>
    %176 = arith.addf %172, %175 : vector<16x32xf32>
    %177 = arith.addf %114, %176 : vector<16x32xf32>
    %cst_90 = arith.constant dense<0.000000e+00> : vector<16xf32>
    %178 = vector.multi_reduction <add>, %177, %cst_90 [1] : vector<16x32xf32> to vector<16xf32>
    %179 = vector.shape_cast %178 : vector<16xf32> to vector<16x1xf32>
    %cst_91 = arith.constant 3.200000e+01 : f32
    %180 = vector.broadcast %cst_91 : f32 to vector<16x1xf32>
    %181 = arith.divf %179, %180 : vector<16x1xf32>
    %182 = arith.mulf %177, %177 : vector<16x32xf32>
    %cst_92 = arith.constant dense<0.000000e+00> : vector<16xf32>
    %183 = vector.multi_reduction <add>, %182, %cst_92 [1] : vector<16x32xf32> to vector<16xf32>
    %184 = vector.shape_cast %183 : vector<16xf32> to vector<16x1xf32>
    %cst_93 = arith.constant 3.200000e+01 : f32
    %185 = vector.broadcast %cst_93 : f32 to vector<16x1xf32>
    %186 = arith.divf %184, %185 : vector<16x1xf32>
    %187 = arith.mulf %181, %181 : vector<16x1xf32>
    %188 = arith.subf %186, %187 : vector<16x1xf32>
    %189 = vector.broadcast %181 : vector<16x1xf32> to vector<16x32xf32>
    %190 = arith.subf %177, %189 : vector<16x32xf32>
    %cst_94 = arith.constant 3.200000e+01 : f32
    %191 = vector.broadcast %cst_94 : f32 to vector<16x1xf32>
    %192 = arith.addf %188, %191 : vector<16x1xf32>
    %193 = math.rsqrt %192 : vector<16x1xf32>
    %194 = vector.broadcast %193 : vector<16x1xf32> to vector<16x32xf32>
    %195 = arith.mulf %190, %194 : vector<16x32xf32>
    %196 = vector.broadcast %116 : vector<1x32xf32> to vector<16x32xf32>
    %197 = arith.mulf %195, %196 : vector<16x32xf32>
    %198 = vector.broadcast %118 : vector<1x32xf32> to vector<16x32xf32>
    %199 = arith.addf %197, %198 : vector<16x32xf32>
    %c1_95 = arith.constant 1 : index
    %c0_96 = arith.constant 0 : index
    %c0_97 = arith.constant 0 : index
    %200 = vector.load %arg12[%c1_95, %c0_96, %c0_97] : memref<2x32x64xf32, #tpu.memory_space<vmem>>, vector<1x32x64xf32>
    %201 = vector.shape_cast %200 : vector<1x32x64xf32> to vector<32x64xf32>
    %cst_98 = arith.constant dense<0.000000e+00> : vector<16x64xf32>
    %202 = tpu.matmul %199, %201, %cst_98 {dimension_numbers = #tpu.dot_dimension_numbers<[1], [0], [0], [1], [0, 0, 1, 1], [], []>} : vector<16x32xf32>, vector<32x64xf32>, vector<16x64xf32> -> vector<16x64xf32>
    %c1_99 = arith.constant 1 : index
    %c0_100 = arith.constant 0 : index
    %c0_101 = arith.constant 0 : index
    %203 = vector.load %arg13[%c1_99, %c0_100, %c0_101] : memref<2x1x64xf32, #tpu.memory_space<vmem>>, vector<1x1x64xf32>
    %204 = vector.shape_cast %203 : vector<1x1x64xf32> to vector<1x64xf32>
    %205 = vector.broadcast %204 : vector<1x64xf32> to vector<16x64xf32>
    %206 = arith.addf %202, %205 : vector<16x64xf32>
    %cst_102 = arith.constant 0.000000e+00 : f32
    %207 = vector.broadcast %cst_102 : f32 to vector<16x64xf32>
    %208 = arith.maximumf %206, %207 : vector<16x64xf32>
    %c1_103 = arith.constant 1 : index
    %c0_104 = arith.constant 0 : index
    %c0_105 = arith.constant 0 : index
    %209 = vector.load %arg14[%c1_103, %c0_104, %c0_105] : memref<2x64x32xf32, #tpu.memory_space<vmem>>, vector<1x64x32xf32>
    %210 = vector.shape_cast %209 : vector<1x64x32xf32> to vector<64x32xf32>
    %cst_106 = arith.constant dense<0.000000e+00> : vector<16x32xf32>
    %211 = tpu.matmul %208, %210, %cst_106 {dimension_numbers = #tpu.dot_dimension_numbers<[1], [0], [0], [1], [0, 0, 1, 1], [], []>} : vector<16x64xf32>, vector<64x32xf32>, vector<16x32xf32> -> vector<16x32xf32>
    %212 = arith.addf %177, %211 : vector<16x32xf32>
    %c1_107 = arith.constant 1 : index
    %c0_108 = arith.constant 0 : index
    %c0_109 = arith.constant 0 : index
    %213 = vector.load %arg15[%c1_107, %c0_108, %c0_109] : memref<2x1x32xf32, #tpu.memory_space<vmem>>, vector<1x1x32xf32>
    %214 = vector.shape_cast %213 : vector<1x1x32xf32> to vector<1x32xf32>
    %215 = vector.broadcast %214 : vector<1x32xf32> to vector<16x32xf32>
    %216 = arith.addf %212, %215 : vector<16x32xf32>
    %c0_110 = arith.constant 0 : index
    %c0_111 = arith.constant 0 : index
    %217 = vector.load %arg16[%c0_110, %c0_111] : memref<1x32xf32, #tpu.memory_space<vmem>>, vector<1x32xf32>
    %c0_112 = arith.constant 0 : index
    %c0_113 = arith.constant 0 : index
    %218 = vector.load %arg17[%c0_112, %c0_113] : memref<1x32xf32, #tpu.memory_space<vmem>>, vector<1x32xf32>
    %cst_114 = arith.constant dense<0.000000e+00> : vector<16xf32>
    %219 = vector.multi_reduction <add>, %216, %cst_114 [1] : vector<16x32xf32> to vector<16xf32>
    %220 = vector.shape_cast %219 : vector<16xf32> to vector<16x1xf32>
    %cst_115 = arith.constant 3.200000e+01 : f32
    %221 = vector.broadcast %cst_115 : f32 to vector<16x1xf32>
    %222 = arith.divf %220, %221 : vector<16x1xf32>
    %223 = arith.mulf %216, %216 : vector<16x32xf32>
    %cst_116 = arith.constant dense<0.000000e+00> : vector<16xf32>
    %224 = vector.multi_reduction <add>, %223, %cst_116 [1] : vector<16x32xf32> to vector<16xf32>
    %225 = vector.shape_cast %224 : vector<16xf32> to vector<16x1xf32>
    %cst_117 = arith.constant 3.200000e+01 : f32
    %226 = vector.broadcast %cst_117 : f32 to vector<16x1xf32>
    %227 = arith.divf %225, %226 : vector<16x1xf32>
    %228 = arith.mulf %222, %222 : vector<16x1xf32>
    %229 = arith.subf %227, %228 : vector<16x1xf32>
    %cst_118 = arith.constant 0.000000e+00 : f32
    %230 = vector.broadcast %cst_118 : f32 to vector<16x1xf32>
    %231 = arith.maximumf %229, %230 : vector<16x1xf32>
    %232 = vector.broadcast %222 : vector<16x1xf32> to vector<16x32xf32>
    %233 = arith.subf %216, %232 : vector<16x32xf32>
    %cst_119 = arith.constant 9.99999997E-7 : f32
    %234 = vector.broadcast %cst_119 : f32 to vector<16x1xf32>
    %235 = arith.addf %231, %234 : vector<16x1xf32>
    %236 = math.rsqrt %235 : vector<16x1xf32>
    %237 = vector.broadcast %236 : vector<16x1xf32> to vector<16x32xf32>
    %238 = arith.mulf %233, %237 : vector<16x32xf32>
    %239 = vector.broadcast %217 : vector<1x32xf32> to vector<16x32xf32>
    %240 = arith.mulf %238, %239 : vector<16x32xf32>
    %241 = vector.broadcast %218 : vector<1x32xf32> to vector<16x32xf32>
    %242 = arith.addf %240, %241 : vector<16x32xf32>
    %c0_120 = arith.constant 0 : index
    %c0_121 = arith.constant 0 : index
    %243 = vector.load %arg18[%c0_120, %c0_121] : memref<16x32xf32, #tpu.memory_space<vmem>>, vector<16x32xf32>
    tpu.vector_store %arg18[%c0_120, %c0_121], %242 {strides = array<i32>} : memref<16x32xf32, #tpu.memory_space<vmem>>, vector<16x32xf32>,
    return
  }
}

</mosaic_0001>

<llo_original>
// kernel: encoder_forward.1
$region0: #{encoder_forward.1}
  #allocation0 [shape = 'u32[]', space=smem, size = 0x4, offset = 0x4, fixed_abs, tag = 'smem constant byte address 0x4 - core index']
  #allocation1 [shape = 'u32[144,128]{1,0:T(1,128)}', space=vmem, size = 0x12000, scoped, tag = 'internal scratch']
  %s0 = inlined_call_operand.vmem [shape: s32[16,1], index: 0, kind: input, shape index: {}]
  %s1 = inlined_call_operand.vmem [shape: f32[64,32], index: 1, kind: input, shape index: {}]
  %s2 = inlined_call_operand.vmem [shape: f32[16,32], index: 2, kind: input, shape index: {}]
  %s3 = inlined_call_operand.vmem [shape: f32[64,16], index: 3, kind: input, shape index: {}]
  %s4 = inlined_call_operand.vmem [shape: f32[64,32], index: 4, kind: input, shape index: {}]
  %s5 = inlined_call_operand.vmem [shape: f32[16,64], index: 5, kind: input, shape index: {}]
  %s6 = inlined_call_operand.vmem [shape: f32[2,1,32], index: 6, kind: input, shape index: {}]
  %s7 = inlined_call_operand.vmem [shape: f32[2,1,32], index: 7, kind: input, shape index: {}]
  %s8 = inlined_call_operand.vmem [shape: f32[2,32,96], index: 8, kind: input, shape index: {}]
  %s9 = inlined_call_operand.vmem [shape: f32[2,1,96], index: 9, kind: input, shape index: {}]
  %s10 = inlined_call_operand.vmem [shape: f32[2,32,32], index: 10, kind: input, shape index: {}]
  %s11 = inlined_call_operand.vmem [shape: f32[2,1,32], index: 11, kind: input, shape index: {}]
  %s12 = inlined_call_operand.vmem [shape: f32[2,32,64], index: 12, kind: input, shape index: {}]
  %s13 = inlined_call_operand.vmem [shape: f32[2,1,64], index: 13, kind: input, shape index: {}]
  %s14 = inlined_call_operand.vmem [shape: f32[2,64,32], index: 14, kind: input, shape index: {}]
  %s15 = inlined_call_operand.vmem [shape: f32[2,1,32], index: 15, kind: input, shape index: {}]
  %s16 = inlined_call_operand.vmem [shape: f32[1,32], index: 16, kind: input, shape index: {}]
  %s17 = inlined_call_operand.vmem [shape: f32[1,32], index: 17, kind: input, shape index: {}]
  %s18 = inlined_call_operand.hbm [shape: f32[16,32], index: 18, kind: output, shape index: {}]
  %s19 = sld [smem:[#allocation0]]
  $region82: #{encoder_forward.1} parent=0
    _
  %s21 = ssub.s32 1, %s19
  %s22 = scalar_select 0, %s21, %s19
  $region1: #{encoder_forward.1} parent=0
    #allocation2 [shape = 'u8[8192]{0}', space=vmem, size = 0x2000, scoped, tag = 'output window, operand 0, single buffered']
    #allocation3 [shape = 's32[1]{0}', space=sflag, size = 0x4, scoped, tag = 'scoped memory for encoder_forward.1']
    %23 = vsyncpa [#allocation3], 0
    // Predicated region
    $region2: #{encoder_forward.1} parent=1 // pred_check
      _
    $region3: #{encoder_forward.1} parent=1 // pred_check_branch
      %25 = sbr.rel (0) target = $region5
    $region4: #{encoder_forward.1} parent=1 // pred_region
      _
    $region5: #{encoder_forward.1} parent=1 // pred_fallthru
      _
    // Predicated region
    $region6: #{encoder_forward.1} parent=1 // pred_check
      _
    $region7: #{encoder_forward.1} parent=1 // pred_check_branch
      %27 = sbr.rel (0) target = $region9
    $region8: #{encoder_forward.1} parent=1 // pred_region
      _
    $region9: #{encoder_forward.1} parent=1 // pred_fallthru
      _
    // Predicated region
    $region10: #{encoder_forward.1} parent=1 // pred_check
      _
    $region11: #{encoder_forward.1} parent=1 // pred_check_branch
      %29 = sbr.rel (0) target = $region13
    $region12: #{encoder_forward.1} parent=1 // pred_region
      _
    $region13: #{encoder_forward.1} parent=1 // pred_fallthru
      _
    // Predicated region
    $region14: #{encoder_forward.1} parent=1 // pred_check
      _
    $region15: #{encoder_forward.1} parent=1 // pred_check_branch
      %31 = sbr.rel (0) target = $region17
    $region16: #{encoder_forward.1} parent=1 // pred_region
      _
    $region17: #{encoder_forward.1} parent=1 // pred_fallthru
      _
    // Predicated region
    $region18: #{encoder_forward.1} parent=1 // pred_check
      _
    $region19: #{encoder_forward.1} parent=1 // pred_check_branch
      %33 = sbr.rel (0) target = $region21
    $region20: #{encoder_forward.1} parent=1 // pred_region
      _
    $region21: #{encoder_forward.1} parent=1 // pred_fallthru
      _
    // Predicated region
    $region22: #{encoder_forward.1} parent=1 // pred_check
      _
    $region23: #{encoder_forward.1} parent=1 // pred_check_branch
      %35 = sbr.rel (0) target = $region25
    $region24: #{encoder_forward.1} parent=1 // pred_region
      _
    $region25: #{encoder_forward.1} parent=1 // pred_fallthru
      _
    // Predicated region
    $region26: #{encoder_forward.1} parent=1 // pred_check
      _
    $region27: #{encoder_forward.1} parent=1 // pred_check_branch
      %37 = sbr.rel (0) target = $region29
    $region28: #{encoder_forward.1} parent=1 // pred_region
      _
    $region29: #{encoder_forward.1} parent=1 // pred_fallthru
      _
    // Predicated region
    $region30: #{encoder_forward.1} parent=1 // pred_check
      _
    $region31: #{encoder_forward.1} parent=1 // pred_check_branch
      %39 = sbr.rel (0) target = $region33
    $region32: #{encoder_forward.1} parent=1 // pred_region
      _
    $region33: #{encoder_forward.1} parent=1 // pred_fallthru
      _
    // Predicated region
    $region34: #{encoder_forward.1} parent=1 // pred_check
      _
    $region35: #{encoder_forward.1} parent=1 // pred_check_branch
      %41 = sbr.rel (0) target = $region37
    $region36: #{encoder_forward.1} parent=1 // pred_region
      _
    $region37: #{encoder_forward.1} parent=1 // pred_fallthru
      _
    // Predicated region
    $region38: #{encoder_forward.1} parent=1 // pred_check
      _
    $region39: #{encoder_forward.1} parent=1 // pred_check_branch
      %43 = sbr.rel (0) target = $region41
    $region40: #{encoder_forward.1} parent=1 // pred_region
      _
    $region41: #{encoder_forward.1} parent=1 // pred_fallthru
      _
    // Predicated region
    $region42: #{encoder_forward.1} parent=1 // pred_check
      _
    $region43: #{encoder_forward.1} parent=1 // pred_check_branch
      %45 = sbr.rel (0) target = $region45
    $region44: #{encoder_forward.1} parent=1 // pred_region
      _
    $region45: #{encoder_forward.1} parent=1 // pred_fallthru
      _
    // Predicated region
    $region46: #{encoder_forward.1} parent=1 // pred_check
      _
    $region47: #{encoder_forward.1} parent=1 // pred_check_branch
      %47 = sbr.rel (0) target = $region49
    $region48: #{encoder_forward.1} parent=1 // pred_region
      _
    $region49: #{encoder_forward.1} parent=1 // pred_fallthru
      _
    // Predicated region
    $region50: #{encoder_forward.1} parent=1 // pred_check
      _
    $region51: #{encoder_forward.1} parent=1 // pred_check_branch
      %49 = sbr.rel (0) target = $region53
    $region52: #{encoder_forward.1} parent=1 // pred_region
      _
    $region53: #{encoder_forward.1} parent=1 // pred_fallthru
      _
    // Predicated region
    $region54: #{encoder_forward.1} parent=1 // pred_check
      _
    $region55: #{encoder_forward.1} parent=1 // pred_check_branch
      %51 = sbr.rel (0) target = $region57
    $region56: #{encoder_forward.1} parent=1 // pred_region
      _
    $region57: #{encoder_forward.1} parent=1 // pred_fallthru
      _
    // Predicated region
    $region58: #{encoder_forward.1} parent=1 // pred_check
      _
    $region59: #{encoder_forward.1} parent=1 // pred_check_branch
      %53 = sbr.rel (0) target = $region61
    $region60: #{encoder_forward.1} parent=1 // pred_region
      _
    $region61: #{encoder_forward.1} parent=1 // pred_fallthru
      _
    // Predicated region
    $region62: #{encoder_forward.1} parent=1 // pred_check
      _
    $region63: #{encoder_forward.1} parent=1 // pred_check_branch
      %55 = sbr.rel (0) target = $region65
    $region64: #{encoder_forward.1} parent=1 // pred_region
      _
    $region65: #{encoder_forward.1} parent=1 // pred_fallthru
      _
    // Predicated region
    $region66: #{encoder_forward.1} parent=1 // pred_check
      _
    $region67: #{encoder_forward.1} parent=1 // pred_check_branch
      %57 = sbr.rel (0) target = $region69
    $region68: #{encoder_forward.1} parent=1 // pred_region
      _
    $region69: #{encoder_forward.1} parent=1 // pred_fallthru
      _
    // Predicated region
    $region70: #{encoder_forward.1} parent=1 // pred_check
      _
    $region71: #{encoder_forward.1} parent=1 // pred_check_branch
      %59 = sbr.rel (0) target = $region73
    $region72: #{encoder_forward.1} parent=1 // pred_region
      _
    $region73: #{encoder_forward.1} parent=1 // pred_fallthru
      _
    %v60 = vld [vmem:[%s0] sm:$0xff]
    %v61 = vld [vmem:[%s0 + $0x8] sm:$0xff]
    %v62 = vlaneseq
    %v63 = vand.u32 %v62, 127
    %64 = vset.pattern.permute.xlu0 0
    %65 = vperm.xlu0 %64, %v60
    %v66 = vpop.permute.xlu0 %65
    %67 = vset.pattern.permute.xlu0 0
    %68 = vperm.xlu0 %67, %v61
    %v69 = vpop.permute.xlu0 %68
    %vm70 = vcmp.eq.s32.totalorder %v66, %v63
    %vm71 = vcmp.eq.s32.totalorder %v69, %v63
    %v72 = vsel %vm70, 1, 0
    %v73 = vsel %vm71, 1, 0
    %v74 = vcvt.s32.f32 %v72
    %v75 = vcvt.s32.f32 %v73
    %v76 = vld [vmem:[%s1] sm:$0xff]
    %v77 = vld [vmem:[%s1 + $0x8] sm:$0xff]
    %v78 = vld [vmem:[%s1 + $0x10] sm:$0xff]
    %v79 = vld [vmem:[%s1 + $0x18] sm:$0xff]
    %v80 = vld [vmem:[%s1 + $0x20] sm:$0xff]
    %v81 = vld [vmem:[%s1 + $0x28] sm:$0xff]
    %v82 = vld [vmem:[%s1 + $0x30] sm:$0xff]
    %v83 = vld [vmem:[%s1 + $0x38] sm:$0xff]
    %v84 = vld [vmem:[%s2] sm:$0xff]
    %v85 = vld [vmem:[%s2 + $0x8] sm:$0xff]
    %vm86 = vcmask 523264
    %v88 = vsel %vm86, %v74, 0
    %v91 = vsel %vm86, %v75, 0
    %93 = vmatprep.subr.mxu0 0.0
    %94 = vmatpush1.msra.mxu0 %v76
    %95 = vmatprep.subr.mxu0 0.0
    %96 = vmatpush1.msra.mxu0 %v77
    %97 = vmatprep.subr.mxu0 0.0
    %98 = vmatpush1.msra.mxu0 %v78
    %99 = vmatprep.subr.mxu0 0.0
    %100 = vmatpush1.msra.mxu0 %v79
    %101 = vmatprep.subr.mxu0 0.0
    %102 = vmatpush1.msra.mxu0 %v80
    %103 = vmatprep.subr.mxu0 0.0
    %104 = vmatpush1.msra.mxu0 %v81
    %105 = vmatprep.subr.mxu0 0.0
    %106 = vmatpush1.msra.mxu0 %v82
    %107 = vmatprep.subr.mxu0 0.0
    %108 = vmatpush1.msra.mxu0 %v83
    %109 = vmatprep.subr.mxu0 0.0
    %110 = vmatpush1.msra.mxu0 0.0
    %111 = vmatprep.subr.mxu0 0.0
    %112 = vmatpush1.msra.mxu0 0.0
    %113 = vmatprep.subr.mxu0 0.0
    %114 = vmatpush1.msra.mxu0 0.0
    %115 = vmatprep.subr.mxu0 0.0
    %116 = vmatpush1.msra.mxu0 0.0
    %117 = vmatprep.subr.mxu0 0.0
    %118 = vmatpush1.msra.mxu0 0.0
    %119 = vmatprep.subr.mxu0 0.0
    %120 = vmatpush1.msra.mxu0 0.0
    %121 = vmatprep.subr.mxu0 0.0
    %122 = vmatpush1.msra.mxu0 0.0
    %123 = vmatprep.subr.mxu0 0.0
    %124 = vmatpush1.msra.mxu0 0.0
    %125 = vmatprep.subr.mxu0 0.0
    %126 = vmatpush1.msra.mxu0 0.0
    %127 = vmatprep.subr.mxu0 0.0
    %128 = vmatpush1.msra.mxu0 0.0
    %129 = vmatprep.subr.mxu0 0.0
    %130 = vmatpush1.msra.mxu0 0.0
    %131 = vmatprep.subr.mxu0 0.0
    %132 = vmatpush1.msra.mxu0 0.0
    %133 = vmatprep.subr.mxu0 0.0
    %134 = vmatpush1.msra.mxu0 0.0
    %135 = vmatprep.subr.mxu0 0.0
    %136 = vmatpush1.msra.mxu0 0.0
    %137 = vmatprep.subr.mxu0 0.0
    %138 = vmatpush1.msra.mxu0 0.0
    %139 = vmatprep.subr.mxu0 0.0
    %140 = vmatpush1.msra.mxu0 0.0
    %141 = vmatprep.subr.mxu0 0.0
    %142 = vmatpush1.msra.mxu0 0.0
    %143 = vmatprep.subr.mxu0 0.0
    %144 = vmatpush1.msra.mxu0 0.0
    %145 = vmatprep.subr.mxu0 0.0
    %146 = vmatpush1.msra.mxu0 0.0
    %147 = vmatprep.subr.mxu0 0.0
    %148 = vmatpush1.msra.mxu0 0.0
    %149 = vmatprep.subr.mxu0 0.0
    %150 = vmatpush1.msra.mxu0 0.0
    %151 = vmatprep.subr.mxu0 0.0
    %152 = vmatpush1.msra.mxu0 0.0
    %153 = vmatprep.subr.mxu0 0.0
    %154 = vmatpush1.msra.mxu0 0.0
    %155 = vmatprep.subr.mxu0 0.0
    %156 = vmatpush1.msra.mxu0 0.0
    %157 = vmatprep.mubr.f32.mxu0 0.0
    %158 = vmatmul.mubr.f32.gmra.mrb[0].mxu0 %v88
    %v159 = vpop.f32.mrb[0].mxu0
    %v160 = vadd.f32 %v84, %v159
    %v161 = vpop.f32.mrb[0].mxu0
    %162 = vmatprep.mubr.f32.mxu0 0.0
    %163 = vmatmul.mubr.f32.gmra.mrb[0].mxu0 %v91
    %v164 = vpop.f32.mrb[0].mxu0
    %v165 = vadd.f32 %v85, %v164
    %v166 = vpop.f32.mrb[0].mxu0
    %167 = vdwg.mxu0
    %v168 = vld [vmem:[%s3] sm:$0xff]
    %v169 = vld [vmem:[%s3 + $0x8] sm:$0xff]
    %v170 = vld [vmem:[%s3 + $0x10] sm:$0xff]
    %v171 = vld [vmem:[%s3 + $0x18] sm:$0xff]
    %v172 = vld [vmem:[%s3 + $0x20] sm:$0xff]
    %v173 = vld [vmem:[%s3 + $0x28] sm:$0xff]
    %v174 = vld [vmem:[%s3 + $0x30] sm:$0xff]
    %v175 = vld [vmem:[%s3 + $0x38] sm:$0xff]
    %v176 = vld [vmem:[%s4] sm:$0xff]
    %v177 = vld [vmem:[%s4 + $0x8] sm:$0xff]
    %v178 = vld [vmem:[%s4 + $0x10] sm:$0xff]
    %v179 = vld [vmem:[%s4 + $0x18] sm:$0xff]
    %v180 = vld [vmem:[%s4 + $0x20] sm:$0xff]
    %v181 = vld [vmem:[%s4 + $0x28] sm:$0xff]
    %v182 = vld [vmem:[%s4 + $0x30] sm:$0xff]
    %v183 = vld [vmem:[%s4 + $0x38] sm:$0xff]
    %v184 = vld [vmem:[%s5] sm:$0xff]
    %v185 = vld [vmem:[%s5 + $0x8] sm:$0xff]
    %v186 = vld [vmem:[%s6] sm:$0x1]
    %v187 = vld [vmem:[%s7] sm:$0x1]
    %vm188 = vcmask 261120
    %v189 = vsel %vm188, %v160, 0.0
    %190 = vadd.xlane.f32.xlu0 %v189
    %v191 = vpop.xlane.xlu0 %190
    %v192 = vsel %vm188, %v165, 0.0
    %193 = vadd.xlane.f32.xlu0 %v192
    %v194 = vpop.xlane.xlu0 %193
    %v195 = vrcp.pop 32.0
    %v196 = vmul.f32 %v191, %v195
    %v197 = vmul.f32 %v194, %v195
    %v198 = vmul.f32 %v160, %v160
    %v199 = vmul.f32 %v165, %v165
    %v200 = vsel %vm188, %v198, 0.0
    %201 = vadd.xlane.f32.xlu0 %v200
    %v202 = vpop.xlane.xlu0 %201
    %v203 = vsel %vm188, %v199, 0.0
    %204 = vadd.xlane.f32.xlu0 %v203
    %v205 = vpop.xlane.xlu0 %204
    %v206 = vmul.f32 %v202, %v195
    %v207 = vmul.f32 %v205, %v195
    %v208 = vmul.f32 %v196, %v196
    %v209 = vmul.f32 %v197, %v197
    %v210 = vsub.f32 %v206, %v208
    %v211 = vsub.f32 %v207, %v209
    %v212 = vsub.f32 %v160, %v196
    %v213 = vsub.f32 %v165, %v197
    %v214 = vadd.f32 %v210, 32.0
    %v215 = vadd.f32 %v211, 32.0
    %v216 = vrsqrt.pop %v214
    %v217 = vrsqrt.pop %v215
    %v218 = vmul.f32 %v212, %v216
    %v219 = vmul.f32 %v213, %v217
    %v221 = vlaneseq
    %v222 = vshrl.u32 %v221, 7
    %v223 = vsub.s32 0, %v222
    %v224 = vrot.slane %v186, %v223
    %v226 = vmul.f32 %v218, %v224
    %v227 = vmul.f32 %v219, %v224
    %v229 = vlaneseq
    %v230 = vshrl.u32 %v229, 7
    %v231 = vsub.s32 0, %v230
    %v232 = vrot.slane %v187, %v231
    %v234 = vadd.f32 %v226, %v232
    %v235 = vadd.f32 %v227, %v232
    %v236 = vld [vmem:[%s8] sm:$0xff]
    %v237 = vld [vmem:[%s8 + $0x8] sm:$0xff]
    %v238 = vld [vmem:[%s8 + $0x10] sm:$0xff]
    %v239 = vld [vmem:[%s8 + $0x18] sm:$0xff]
    %v240 = vld [vmem:[%s9] sm:$0x1]
    %v242 = vlaneseq
    %v243 = vshrl.u32 %v242, 7
    %v244 = vsub.s32 0, %v243
    %v245 = vrot.slane %v240, %v244
    %v248 = vsel %vm188, %v234, 0
    %v251 = vsel %vm188, %v235, 0
    %253 = vmatprep.subr.mxu0 0.0
    %254 = vmatpush1.msra.mxu0 %v236
    %255 = vmatprep.subr.mxu0 0.0
    %256 = vmatpush1.msra.mxu0 %v237
    %257 = vmatprep.subr.mxu0 0.0
    %258 = vmatpush1.msra.mxu0 %v238
    %259 = vmatprep.subr.mxu0 0.0
    %260 = vmatpush1.msra.mxu0 %v239
    %261 = vmatprep.subr.mxu0 0.0
    %262 = vmatpush1.msra.mxu0 0.0
    %263 = vmatprep.subr.mxu0 0.0
    %264 = vmatpush1.msra.mxu0 0.0
    %265 = vmatprep.subr.mxu0 0.0
    %266 = vmatpush1.msra.mxu0 0.0
    %267 = vmatprep.subr.mxu0 0.0
    %268 = vmatpush1.msra.mxu0 0.0
    %269 = vmatprep.subr.mxu0 0.0
    %270 = vmatpush1.msra.mxu0 0.0
    %271 = vmatprep.subr.mxu0 0.0
    %272 = vmatpush1.msra.mxu0 0.0
    %273 = vmatprep.subr.mxu0 0.0
    %274 = vmatpush1.msra.mxu0 0.0
    %275 = vmatprep.subr.mxu0 0.0
    %276 = vmatpush1.msra.mxu0 0.0
    %277 = vmatprep.subr.mxu0 0.0
    %278 = vmatpush1.msra.mxu0 0.0
    %279 = vmatprep.subr.mxu0 0.0
    %280 = vmatpush1.msra.mxu0 0.0
    %281 = vmatprep.subr.mxu0 0.0
    %282 = vmatpush1.msra.mxu0 0.0
    %283 = vmatprep.subr.mxu0 0.0
    %284 = vmatpush1.msra.mxu0 0.0
    %285 = vmatprep.subr.mxu0 0.0
    %286 = vmatpush1.msra.mxu0 0.0
    %287 = vmatprep.subr.mxu0 0.0
    %288 = vmatpush1.msra.mxu0 0.0
    %289 = vmatprep.subr.mxu0 0.0
    %290 = vmatpush1.msra.mxu0 0.0
    %291 = vmatprep.subr.mxu0 0.0
    %292 = vmatpush1.msra.mxu0 0.0
    %293 = vmatprep.subr.mxu0 0.0
    %294 = vmatpush1.msra.mxu0 0.0
    %295 = vmatprep.subr.mxu0 0.0
    %296 = vmatpush1.msra.mxu0 0.0
    %297 = vmatprep.subr.mxu0 0.0
    %298 = vmatpush1.msra.mxu0 0.0
    %299 = vmatprep.subr.mxu0 0.0
    %300 = vmatpush1.msra.mxu0 0.0
    %301 = vmatprep.subr.mxu0 0.0
    %302 = vmatpush1.msra.mxu0 0.0
    %303 = vmatprep.subr.mxu0 0.0
    %304 = vmatpush1.msra.mxu0 0.0
    %305 = vmatprep.subr.mxu0 0.0
    %306 = vmatpush1.msra.mxu0 0.0
    %307 = vmatprep.subr.mxu0 0.0
    %308 = vmatpush1.msra.mxu0 0.0
    %309 = vmatprep.subr.mxu0 0.0
    %310 = vmatpush1.msra.mxu0 0.0
    %311 = vmatprep.subr.mxu0 0.0
    %312 = vmatpush1.msra.mxu0 0.0
    %313 = vmatprep.subr.mxu0 0.0
    %314 = vmatpush1.msra.mxu0 0.0
    %315 = vmatprep.subr.mxu0 0.0
    %316 = vmatpush1.msra.mxu0 0.0
    %317 = vmatprep.mubr.f32.mxu0 0.0
    %318 = vmatmul.mubr.f32.gmra.mrb[0].mxu0 %v248
    %v319 = vpop.f32.mrb[0].mxu0
    %v320 = vadd.f32 %v245, %v319
    %v321 = vpop.f32.mrb[0].mxu0
    %322 = vmatprep.mubr.f32.mxu0 0.0
    %323 = vmatmul.mubr.f32.gmra.mrb[0].mxu0 %v251
    %v324 = vpop.f32.mrb[0].mxu0
    %v325 = vadd.f32 %v245, %v324
    %v326 = vpop.f32.mrb[0].mxu0
    %327 = vdwg.mxu0
    %v328 = vmul.f32 %v320, %v176
    %v329 = vmul.f32 %v320, %v177
    %v330 = vmul.f32 %v320, %v178
    %v331 = vmul.f32 %v320, %v179
    %v332 = vmul.f32 %v325, %v180
    %v333 = vmul.f32 %v325, %v181
    %v334 = vmul.f32 %v325, %v182
    %v335 = vmul.f32 %v325, %v183
    %338 = vrot.lane.b32.xlu0 %v320, 96
    %v339 = vpop.permute.xlu0 %338
    %340 = vrot.lane.b32.xlu0 %v325, 96
    %v341 = vpop.permute.xlu0 %340
    %v343 = vsel %vm188, %v328, 0
    %v346 = vsel %vm188, %v329, 0
    %v349 = vsel %vm188, %v330, 0
    %v352 = vsel %vm188, %v331, 0
    %v355 = vsel %vm188, %v332, 0
    %v358 = vsel %vm188, %v333, 0
    %v361 = vsel %vm188, %v334, 0
    %v364 = vsel %vm188, %v335, 0
    %v366 = vsel %vm188, %v339, 0
    %v368 = vsel %vm188, %v341, 0
    %370 = vmatprep.subr.mxu0 0.0
    %371 = vmatpush1.xpose.msra.mxu0 %v366
    %372 = vmatprep.subr.mxu0 0.0
    %373 = vmatpush1.xpose.msra.mxu0 %v368
    %374 = vmatprep.subr.mxu0 0.0
    %375 = vmatpush1.xpose.msra.mxu0 0.0
    %376 = vmatprep.subr.mxu0 0.0
    %377 = vmatpush1.xpose.msra.mxu0 0.0
    %378 = vmatprep.subr.mxu0 0.0
    %379 = vmatpush1.xpose.msra.mxu0 0.0
    %380 = vmatprep.subr.mxu0 0.0
    %381 = vmatpush1.xpose.msra.mxu0 0.0
    %382 = vmatprep.subr.mxu0 0.0
    %383 = vmatpush1.xpose.msra.mxu0 0.0
    %384 = vmatprep.subr.mxu0 0.0
    %385 = vmatpush1.xpose.msra.mxu0 0.0
    %386 = vmatprep.subr.mxu0 0.0
    %387 = vmatpush1.xpose.msra.mxu0 0.0
    %388 = vmatprep.subr.mxu0 0.0
    %389 = vmatpush1.xpose.msra.mxu0 0.0
    %390 = vmatprep.subr.mxu0 0.0
    %391 = vmatpush1.xpose.msra.mxu0 0.0
    %392 = vmatprep.subr.mxu0 0.0
    %393 = vmatpush1.xpose.msra.mxu0 0.0
    %394 = vmatprep.subr.mxu0 0.0
    %395 = vmatpush1.xpose.msra.mxu0 0.0
    %396 = vmatprep.subr.mxu0 0.0
    %397 = vmatpush1.xpose.msra.mxu0 0.0
    %398 = vmatprep.subr.mxu0 0.0
    %399 = vmatpush1.xpose.msra.mxu0 0.0
    %400 = vmatprep.subr.mxu0 0.0
    %401 = vmatpush1.xpose.msra.mxu0 0.0
    %402 = vmatprep.subr.mxu0 0.0
    %403 = vmatpush1.xpose.msra.mxu0 0.0
    %404 = vmatprep.subr.mxu0 0.0
    %405 = vmatpush1.xpose.msra.mxu0 0.0
    %406 = vmatprep.subr.mxu0 0.0
    %407 = vmatpush1.xpose.msra.mxu0 0.0
    %408 = vmatprep.subr.mxu0 0.0
    %409 = vmatpush1.xpose.msra.mxu0 0.0
    %410 = vmatprep.subr.mxu0 0.0
    %411 = vmatpush1.xpose.msra.mxu0 0.0
    %412 = vmatprep.subr.mxu0 0.0
    %413 = vmatpush1.xpose.msra.mxu0 0.0
    %414 = vmatprep.subr.mxu0 0.0
    %415 = vmatpush1.xpose.msra.mxu0 0.0
    %416 = vmatprep.subr.mxu0 0.0
    %417 = vmatpush1.xpose.msra.mxu0 0.0
    %418 = vmatprep.subr.mxu0 0.0
    %419 = vmatpush1.xpose.msra.mxu0 0.0
    %420 = vmatprep.subr.mxu0 0.0
    %421 = vmatpush1.xpose.msra.mxu0 0.0
    %422 = vmatprep.subr.mxu0 0.0
    %423 = vmatpush1.xpose.msra.mxu0 0.0
    %424 = vmatprep.subr.mxu0 0.0
    %425 = vmatpush1.xpose.msra.mxu0 0.0
    %426 = vmatprep.subr.mxu0 0.0
    %427 = vmatpush1.xpose.msra.mxu0 0.0
    %428 = vmatprep.subr.mxu0 0.0
    %429 = vmatpush1.xpose.msra.mxu0 0.0
    %430 = vmatprep.subr.mxu0 0.0
    %431 = vmatpush1.xpose.msra.mxu0 0.0
    %432 = vmatprep.subr.mxu0 0.0
    %433 = vmatpush1.xpose.msra.mxu0 0.0
    %434 = vmatprep.mubr.f32.mxu0 0.0
    %435 = vmatmul.mubr.f32.gmra.mrb[0].mxu0 %v343
    %v436 = vpop.f32.mrb[0].mxu0
    %v437 = vadd.f32 %v168, %v436
    %v438 = vpop.f32.mrb[0].mxu0
    %439 = vmatprep.mubr.f32.mxu0 0.0
    %440 = vmatmul.mubr.f32.gmra.mrb[0].mxu0 %v346
    %v441 = vpop.f32.mrb[0].mxu0
    %v442 = vadd.f32 %v169, %v441
    %v443 = vpop.f32.mrb[0].mxu0
    %444 = vmatprep.mubr.f32.mxu0 0.0
    %445 = vmatmul.mubr.f32.gmra.mrb[0].mxu0 %v349
    %v446 = vpop.f32.mrb[0].mxu0
    %v447 = vadd.f32 %v170, %v446
    %v448 = vpop.f32.mrb[0].mxu0
    %449 = vmatprep.mubr.f32.mxu0 0.0
    %450 = vmatmul.mubr.f32.gmra.mrb[0].mxu0 %v352
    %v451 = vpop.f32.mrb[0].mxu0
    %v452 = vadd.f32 %v171, %v451
    %v453 = vpop.f32.mrb[0].mxu0
    %454 = vmatprep.mubr.f32.mxu0 0.0
    %455 = vmatmul.mubr.f32.gmra.mrb[0].mxu0 %v355
    %v456 = vpop.f32.mrb[0].mxu0
    %v457 = vadd.f32 %v172, %v456
    %v458 = vpop.f32.mrb[0].mxu0
    %459 = vmatprep.mubr.f32.mxu0 0.0
    %460 = vmatmul.mubr.f32.gmra.mrb[0].mxu0 %v358
    %v461 = vpop.f32.mrb[0].mxu0
    %v462 = vadd.f32 %v173, %v461
    %v463 = vpop.f32.mrb[0].mxu0
    %464 = vmatprep.mubr.f32.mxu0 0.0
    %465 = vmatmul.mubr.f32.gmra.mrb[0].mxu0 %v361
    %v466 = vpop.f32.mrb[0].mxu0
    %v467 = vadd.f32 %v174, %v466
    %v468 = vpop.f32.mrb[0].mxu0
    %469 = vmatprep.mubr.f32.mxu0 0.0
    %470 = vmatmul.mubr.f32.gmra.mrb[0].mxu0 %v364
    %v471 = vpop.f32.mrb[0].mxu0
    %v472 = vadd.f32 %v175, %v471
    %v473 = vpop.f32.mrb[0].mxu0
    %474 = vdwg.mxu0
    %vm475 = vcmask 130048
    %v476 = vsel %vm475, %v437, -inf
    %477 = vmax.xlane.f32.xlu0 %v476
    %v478 = vpop.xlane.xlu0 %477
    %v479 = vsel %vm475, %v442, -inf
    %480 = vmax.xlane.f32.xlu0 %v479
    %v481 = vpop.xlane.xlu0 %480
    %v482 = vsel %vm475, %v447, -inf
    %483 = vmax.xlane.f32.xlu0 %v482
    %v484 = vpop.xlane.xlu0 %483
    %v485 = vsel %vm475, %v452, -inf
    %486 = vmax.xlane.f32.xlu0 %v485
    %v487 = vpop.xlane.xlu0 %486
    %v488 = vsel %vm475, %v457, -inf
    %489 = vmax.xlane.f32.xlu0 %v488
    %v490 = vpop.xlane.xlu0 %489
    %v491 = vsel %vm475, %v462, -inf
    %492 = vmax.xlane.f32.xlu0 %v491
    %v493 = vpop.xlane.xlu0 %492
    %v494 = vsel %vm475, %v467, -inf
    %495 = vmax.xlane.f32.xlu0 %v494
    %v496 = vpop.xlane.xlu0 %495
    %v497 = vsel %vm475, %v472, -inf
    %498 = vmax.xlane.f32.xlu0 %v497
    %v499 = vpop.xlane.xlu0 %498
    %v500 = vsub.f32 %v437, %v478
    %v501 = vsub.f32 %v442, %v481
    %v502 = vsub.f32 %v447, %v484
    %v503 = vsub.f32 %v452, %v487
    %v504 = vsub.f32 %v457, %v490
    %v505 = vsub.f32 %v462, %v493
    %v506 = vsub.f32 %v467, %v496
    %v507 = vsub.f32 %v472, %v499
    %v508 = vmul.f32 %v500, 1.442695
    %v509 = vpow.pop %v508
    %v510 = vmul.f32 %v501, 1.442695
    %v511 = vpow.pop %v510
    %v512 = vmul.f32 %v502, 1.442695
    %v513 = vpow.pop %v512
    %v514 = vmul.f32 %v503, 1.442695
    %v515 = vpow.pop %v514
    %v516 = vmul.f32 %v504, 1.442695
    %v517 = vpow.pop %v516
    %v518 = vmul.f32 %v505, 1.442695
    %v519 = vpow.pop %v518
    %v520 = vmul.f32 %v506, 1.442695
    %v521 = vpow.pop %v520
    %v522 = vmul.f32 %v507, 1.442695
    %v523 = vpow.pop %v522
    %v524 = vsel %vm475, %v509, 0.0
    %525 = vadd.xlane.f32.xlu0 %v524
    %v526 = vpop.xlane.xlu0 %525
    %v527 = vsel %vm475, %v511, 0.0
    %528 = vadd.xlane.f32.xlu0 %v527
    %v529 = vpop.xlane.xlu0 %528
    %v530 = vsel %vm475, %v513, 0.0
    %531 = vadd.xlane.f32.xlu0 %v530
    %v532 = vpop.xlane.xlu0 %531
    %v533 = vsel %vm475, %v515, 0.0
    %534 = vadd.xlane.f32.xlu0 %v533
    %v535 = vpop.xlane.xlu0 %534
    %v536 = vsel %vm475, %v517, 0.0
    %537 = vadd.xlane.f32.xlu0 %v536
    %v538 = vpop.xlane.xlu0 %537
    %v539 = vsel %vm475, %v519, 0.0
    %540 = vadd.xlane.f32.xlu0 %v539
    %v541 = vpop.xlane.xlu0 %540
    %v542 = vsel %vm475, %v521, 0.0
    %543 = vadd.xlane.f32.xlu0 %v542
    %v544 = vpop.xlane.xlu0 %543
    %v545 = vsel %vm475, %v523, 0.0
    %546 = vadd.xlane.f32.xlu0 %v545
    %v547 = vpop.xlane.xlu0 %546
    %v548 = vrcp.pop %v526
    %v549 = vrcp.pop %v529
    %v550 = vrcp.pop %v532
    %v551 = vrcp.pop %v535
    %v552 = vrcp.pop %v538
    %v553 = vrcp.pop %v541
    %v554 = vrcp.pop %v544
    %v555 = vrcp.pop %v547
    %v556 = vmul.f32 %v509, %v548
    %v557 = vmul.f32 %v511, %v549
    %v558 = vmul.f32 %v513, %v550
    %v559 = vmul.f32 %v515, %v551
    %v560 = vmul.f32 %v517, %v552
    %v561 = vmul.f32 %v519, %v553
    %v562 = vmul.f32 %v521, %v554
    %v563 = vmul.f32 %v523, %v555
    %564 = vrot.lane.b32.xlu0 %v320, 64
    %v565 = vpop.permute.xlu0 %564
    %566 = vrot.lane.b32.xlu0 %v325, 64
    %v567 = vpop.permute.xlu0 %566
    %v571 = vsel %vm475, %v556, 0
    %v574 = vsel %vm475, %v557, 0
    %v577 = vsel %vm475, %v558, 0
    %v580 = vsel %vm475, %v559, 0
    %v583 = vsel %vm475, %v560, 0
    %v586 = vsel %vm475, %v561, 0
    %v589 = vsel %vm475, %v562, 0
    %v592 = vsel %vm475, %v563, 0
    %594 = vmatprep.subr.mxu0 0.0
    %595 = vmatpush1.msra.mxu0 %v565
    %596 = vmatprep.subr.mxu0 0.0
    %597 = vmatpush1.msra.mxu0 %v567
    %598 = vmatprep.subr.mxu0 0.0
    %599 = vmatpush1.msra.mxu0 0.0
    %600 = vmatprep.subr.mxu0 0.0
    %601 = vmatpush1.msra.mxu0 0.0
    %602 = vmatprep.subr.mxu0 0.0
    %603 = vmatpush1.msra.mxu0 0.0
    %604 = vmatprep.subr.mxu0 0.0
    %605 = vmatpush1.msra.mxu0 0.0
    %606 = vmatprep.subr.mxu0 0.0
    %607 = vmatpush1.msra.mxu0 0.0
    %608 = vmatprep.subr.mxu0 0.0
    %609 = vmatpush1.msra.mxu0 0.0
    %610 = vmatprep.subr.mxu0 0.0
    %611 = vmatpush1.msra.mxu0 0.0
    %612 = vmatprep.subr.mxu0 0.0
    %613 = vmatpush1.msra.mxu0 0.0
    %614 = vmatprep.subr.mxu0 0.0
    %615 = vmatpush1.msra.mxu0 0.0
    %616 = vmatprep.subr.mxu0 0.0
    %617 = vmatpush1.msra.mxu0 0.0
    %618 = vmatprep.subr.mxu0 0.0
    %619 = vmatpush1.msra.mxu0 0.0
    %620 = vmatprep.subr.mxu0 0.0
    %621 = vmatpush1.msra.mxu0 0.0
    %622 = vmatprep.subr.mxu0 0.0
    %623 = vmatpush1.msra.mxu0 0.0
    %624 = vmatprep.subr.mxu0 0.0
    %625 = vmatpush1.msra.mxu0 0.0
    %626 = vmatprep.subr.mxu0 0.0
    %627 = vmatpush1.msra.mxu0 0.0
    %628 = vmatprep.subr.mxu0 0.0
    %629 = vmatpush1.msra.mxu0 0.0
    %630 = vmatprep.subr.mxu0 0.0
    %631 = vmatpush1.msra.mxu0 0.0
    %632 = vmatprep.subr.mxu0 0.0
    %633 = vmatpush1.msra.mxu0 0.0
    %634 = vmatprep.subr.mxu0 0.0
    %635 = vmatpush1.msra.mxu0 0.0
    %636 = vmatprep.subr.mxu0 0.0
    %637 = vmatpush1.msra.mxu0 0.0
    %638 = vmatprep.subr.mxu0 0.0
    %639 = vmatpush1.msra.mxu0 0.0
    %640 = vmatprep.subr.mxu0 0.0
    %641 = vmatpush1.msra.mxu0 0.0
    %642 = vmatprep.subr.mxu0 0.0
    %643 = vmatpush1.msra.mxu0 0.0
    %644 = vmatprep.subr.mxu0 0.0
    %645 = vmatpush1.msra.mxu0 0.0
    %646 = vmatprep.subr.mxu0 0.0
    %647 = vmatpush1.msra.mxu0 0.0
    %648 = vmatprep.subr.mxu0 0.0
    %649 = vmatpush1.msra.mxu0 0.0
    %650 = vmatprep.subr.mxu0 0.0
    %651 = vmatpush1.msra.mxu0 0.0
    %652 = vmatprep.subr.mxu0 0.0
    %653 = vmatpush1.msra.mxu0 0.0
    %654 = vmatprep.subr.mxu0 0.0
    %655 = vmatpush1.msra.mxu0 0.0
    %656 = vmatprep.subr.mxu0 0.0
    %657 = vmatpush1.msra.mxu0 0.0
    %658 = vmatprep.mubr.f32.mxu0 0.0
    %659 = vmatmul.mubr.f32.gmra.mrb[0].mxu0 %v571
    %v660 = vpop.f32.mrb[0].mxu0
    %v661 = vadd.f32 0.0, %v660
    %v662 = vpop.f32.mrb[0].mxu0
    %663 = vmatprep.mubr.f32.mxu0 0.0
    %664 = vmatmul.mubr.f32.gmra.mrb[0].mxu0 %v574
    %v665 = vpop.f32.mrb[0].mxu0
    %v666 = vadd.f32 0.0, %v665
    %v667 = vpop.f32.mrb[0].mxu0
    %668 = vmatprep.mubr.f32.mxu0 0.0
    %669 = vmatmul.mubr.f32.gmra.mrb[0].mxu0 %v577
    %v670 = vpop.f32.mrb[0].mxu0
    %v671 = vadd.f32 0.0, %v670
    %v672 = vpop.f32.mrb[0].mxu0
    %673 = vmatprep.mubr.f32.mxu0 0.0
    %674 = vmatmul.mubr.f32.gmra.mrb[0].mxu0 %v580
    %v675 = vpop.f32.mrb[0].mxu0
    %v676 = vadd.f32 0.0, %v675
    %v677 = vpop.f32.mrb[0].mxu0
    %678 = vmatprep.mubr.f32.mxu0 0.0
    %679 = vmatmul.mubr.f32.gmra.mrb[0].mxu0 %v583
    %v680 = vpop.f32.mrb[0].mxu0
    %v681 = vadd.f32 0.0, %v680
    %v682 = vpop.f32.mrb[0].mxu0
    %683 = vmatprep.mubr.f32.mxu0 0.0
    %684 = vmatmul.mubr.f32.gmra.mrb[0].mxu0 %v586
    %v685 = vpop.f32.mrb[0].mxu0
    %v686 = vadd.f32 0.0, %v685
    %v687 = vpop.f32.mrb[0].mxu0
    %688 = vmatprep.mubr.f32.mxu0 0.0
    %689 = vmatmul.mubr.f32.gmra.mrb[0].mxu0 %v589
    %v690 = vpop.f32.mrb[0].mxu0
    %v691 = vadd.f32 0.0, %v690
    %v692 = vpop.f32.mrb[0].mxu0
    %693 = vmatprep.mubr.f32.mxu0 0.0
    %694 = vmatmul.mubr.f32.gmra.mrb[0].mxu0 %v592
    %v695 = vpop.f32.mrb[0].mxu0
    %v696 = vadd.f32 0.0, %v695
    %v697 = vpop.f32.mrb[0].mxu0
    %698 = vdwg.mxu0
    %v699 = vmul.f32 %v661, %v176
    %v700 = vmul.f32 %v666, %v177
    %v701 = vmul.f32 %v671, %v178
    %v702 = vmul.f32 %v676, %v179
    %v703 = vmul.f32 %v681, %v180
    %v704 = vmul.f32 %v686, %v181
    %v705 = vmul.f32 %v691, %v182
    %v706 = vmul.f32 %v696, %v183
    %v708 = vsel %vm86, %v184, 0
    %v711 = vsel %vm86, %v185, 0
    %713 = vmatprep.subr.mxu0 0.0
    %714 = vmatpush1.msra.mxu0 %v699
    %715 = vmatprep.subr.mxu0 0.0
    %716 = vmatpush1.msra.mxu0 %v700
    %717 = vmatprep.subr.mxu0 0.0
    %718 = vmatpush1.msra.mxu0 %v701
    %719 = vmatprep.subr.mxu0 0.0
    %720 = vmatpush1.msra.mxu0 %v702
    %721 = vmatprep.subr.mxu0 0.0
    %722 = vmatpush1.msra.mxu0 %v703
    %723 = vmatprep.subr.mxu0 0.0
    %724 = vmatpush1.msra.mxu0 %v704
    %725 = vmatprep.subr.mxu0 0.0
    %726 = vmatpush1.msra.mxu0 %v705
    %727 = vmatprep.subr.mxu0 0.0
    %728 = vmatpush1.msra.mxu0 %v706
    %729 = vmatprep.subr.mxu0 0.0
    %730 = vmatpush1.msra.mxu0 0.0
    %731 = vmatprep.subr.mxu0 0.0
    %732 = vmatpush1.msra.mxu0 0.0
    %733 = vmatprep.subr.mxu0 0.0
    %734 = vmatpush1.msra.mxu0 0.0
    %735 = vmatprep.subr.mxu0 0.0
    %736 = vmatpush1.msra.mxu0 0.0
    %737 = vmatprep.subr.mxu0 0.0
    %738 = vmatpush1.msra.mxu0 0.0
    %739 = vmatprep.subr.mxu0 0.0
    %740 = vmatpush1.msra.mxu0 0.0
    %741 = vmatprep.subr.mxu0 0.0
    %742 = vmatpush1.msra.mxu0 0.0
    %743 = vmatprep.subr.mxu0 0.0
    %744 = vmatpush1.msra.mxu0 0.0
    %745 = vmatprep.subr.mxu0 0.0
    %746 = vmatpush1.msra.mxu0 0.0
    %747 = vmatprep.subr.mxu0 0.0
    %748 = vmatpush1.msra.mxu0 0.0
    %749 = vmatprep.subr.mxu0 0.0
    %750 = vmatpush1.msra.mxu0 0.0
    %751 = vmatprep.subr.mxu0 0.0
    %752 = vmatpush1.msra.mxu0 0.0
    %753 = vmatprep.subr.mxu0 0.0
    %754 = vmatpush1.msra.mxu0 0.0
    %755 = vmatprep.subr.mxu0 0.0
    %756 = vmatpush1.msra.mxu0 0.0
    %757 = vmatprep.subr.mxu0 0.0
    %758 = vmatpush1.msra.mxu0 0.0
    %759 = vmatprep.subr.mxu0 0.0
    %760 = vmatpush1.msra.mxu0 0.0
    %761 = vmatprep.subr.mxu0 0.0
    %762 = vmatpush1.msra.mxu0 0.0
    %763 = vmatprep.subr.mxu0 0.0
    %764 = vmatpush1.msra.mxu0 0.0
    %765 = vmatprep.subr.mxu0 0.0
    %766 = vmatpush1.msra.mxu0 0.0
    %767 = vmatprep.subr.mxu0 0.0
    %768 = vmatpush1.msra.mxu0 0.0
    %769 = vmatprep.subr.mxu0 0.0
    %770 = vmatpush1.msra.mxu0 0.0
    %771 = vmatprep.subr.mxu0 0.0
    %772 = vmatpush1.msra.mxu0 0.0
    %773 = vmatprep.subr.mxu0 0.0
    %774 = vmatpush1.msra.mxu0 0.0
    %775 = vmatprep.subr.mxu0 0.0
    %776 = vmatpush1.msra.mxu0 0.0
    %777 = vmatprep.mubr.f32.mxu0 0.0
    %778 = vmatmul.mubr.f32.gmra.mrb[0].mxu0 %v708
    %v779 = vpop.f32.mrb[0].mxu0
    %v780 = vadd.f32 0.0, %v779
    %v781 = vpop.f32.mrb[0].mxu0
    %782 = vmatprep.mubr.f32.mxu0 0.0
    %783 = vmatmul.mubr.f32.gmra.mrb[0].mxu0 %v711
    %v784 = vpop.f32.mrb[0].mxu0
    %v785 = vadd.f32 0.0, %v784
    %v786 = vpop.f32.mrb[0].mxu0
    %787 = vdwg.mxu0
    %v788 = vld [vmem:[%s10] sm:$0xff]
    %v789 = vld [vmem:[%s10 + $0x8] sm:$0xff]
    %v790 = vld [vmem:[%s10 + $0x10] sm:$0xff]
    %v791 = vld [vmem:[%s10 + $0x18] sm:$0xff]
    %v792 = vld [vmem:[%s11] sm:$0x1]
    %v794 = vlaneseq
    %v795 = vshrl.u32 %v794, 7
    %v796 = vsub.s32 0, %v795
    %v797 = vrot.slane %v792, %v796
    %v800 = vsel %vm188, %v780, 0
    %v803 = vsel %vm188, %v785, 0
    %805 = vmatprep.subr.mxu0 0.0
    %806 = vmatpush1.msra.mxu0 %v788
    %807 = vmatprep.subr.mxu0 0.0
    %808 = vmatpush1.msra.mxu0 %v789
    %809 = vmatprep.subr.mxu0 0.0
    %810 = vmatpush1.msra.mxu0 %v790
    %811 = vmatprep.subr.mxu0 0.0
    %812 = vmatpush1.msra.mxu0 %v791
    %813 = vmatprep.subr.mxu0 0.0
    %814 = vmatpush1.msra.mxu0 0.0
    %815 = vmatprep.subr.mxu0 0.0
    %816 = vmatpush1.msra.mxu0 0.0
    %817 = vmatprep.subr.mxu0 0.0
    %818 = vmatpush1.msra.mxu0 0.0
    %819 = vmatprep.subr.mxu0 0.0
    %820 = vmatpush1.msra.mxu0 0.0
    %821 = vmatprep.subr.mxu0 0.0
    %822 = vmatpush1.msra.mxu0 0.0
    %823 = vmatprep.subr.mxu0 0.0
    %824 = vmatpush1.msra.mxu0 0.0
    %825 = vmatprep.subr.mxu0 0.0
    %826 = vmatpush1.msra.mxu0 0.0
    %827 = vmatprep.subr.mxu0 0.0
    %828 = vmatpush1.msra.mxu0 0.0
    %829 = vmatprep.subr.mxu0 0.0
    %830 = vmatpush1.msra.mxu0 0.0
    %831 = vmatprep.subr.mxu0 0.0
    %832 = vmatpush1.msra.mxu0 0.0
    %833 = vmatprep.subr.mxu0 0.0
    %834 = vmatpush1.msra.mxu0 0.0
    %835 = vmatprep.subr.mxu0 0.0
    %836 = vmatpush1.msra.mxu0 0.0
    %837 = vmatprep.subr.mxu0 0.0
    %838 = vmatpush1.msra.mxu0 0.0
    %839 = vmatprep.subr.mxu0 0.0
    %840 = vmatpush1.msra.mxu0 0.0
    %841 = vmatprep.subr.mxu0 0.0
    %842 = vmatpush1.msra.mxu0 0.0
    %843 = vmatprep.subr.mxu0 0.0
    %844 = vmatpush1.msra.mxu0 0.0
    %845 = vmatprep.subr.mxu0 0.0
    %846 = vmatpush1.msra.mxu0 0.0
    %847 = vmatprep.subr.mxu0 0.0
    %848 = vmatpush1.msra.mxu0 0.0
    %849 = vmatprep.subr.mxu0 0.0
    %850 = vmatpush1.msra.mxu0 0.0
    %851 = vmatprep.subr.mxu0 0.0
    %852 = vmatpush1.msra.mxu0 0.0
    %853 = vmatprep.subr.mxu0 0.0
    %854 = vmatpush1.msra.mxu0 0.0
    %855 = vmatprep.subr.mxu0 0.0
    %856 = vmatpush1.msra.mxu0 0.0
    %857 = vmatprep.subr.mxu0 0.0
    %858 = vmatpush1.msra.mxu0 0.0
    %859 = vmatprep.subr.mxu0 0.0
    %860 = vmatpush1.msra.mxu0 0.0
    %861 = vmatprep.subr.mxu0 0.0
    %862 = vmatpush1.msra.mxu0 0.0
    %863 = vmatprep.subr.mxu0 0.0
    %864 = vmatpush1.msra.mxu0 0.0
    %865 = vmatprep.subr.mxu0 0.0
    %866 = vmatpush1.msra.mxu0 0.0
    %867 = vmatprep.subr.mxu0 0.0
    %868 = vmatpush1.msra.mxu0 0.0
    %869 = vmatprep.mubr.f32.mxu0 0.0
    %870 = vmatmul.mubr.f32.gmra.mrb[0].mxu0 %v800
    %v871 = vpop.f32.mrb[0].mxu0
    %v872 = vadd.f32 %v797, %v871
    %v873 = vpop.f32.mrb[0].mxu0
    %874 = vmatprep.mubr.f32.mxu0 0.0
    %875 = vmatmul.mubr.f32.gmra.mrb[0].mxu0 %v803
    %v876 = vpop.f32.mrb[0].mxu0
    %v877 = vadd.f32 %v797, %v876
    %v878 = vpop.f32.mrb[0].mxu0
    %879 = vdwg.mxu0
    %v880 = vadd.f32 %v160, %v872
    %v881 = vadd.f32 %v165, %v877
    %v882 = vsel %vm188, %v880, 0.0
    %883 = vadd.xlane.f32.xlu0 %v882
    %v884 = vpop.xlane.xlu0 %883
    %v885 = vsel %vm188, %v881, 0.0
    %886 = vadd.xlane.f32.xlu0 %v885
    %v887 = vpop.xlane.xlu0 %886
    %v888 = vmul.f32 %v884, %v195
    %v889 = vmul.f32 %v887, %v195
    %v890 = vmul.f32 %v880, %v880
    %v891 = vmul.f32 %v881, %v881
    %v892 = vsel %vm188, %v890, 0.0
    %893 = vadd.xlane.f32.xlu0 %v892
    %v894 = vpop.xlane.xlu0 %893
    %v895 = vsel %vm188, %v891, 0.0
    %896 = vadd.xlane.f32.xlu0 %v895
    %v897 = vpop.xlane.xlu0 %896
    %v898 = vmul.f32 %v894, %v195
    %v899 = vmul.f32 %v897, %v195
    %v900 = vmul.f32 %v888, %v888
    %v901 = vmul.f32 %v889, %v889
    %v902 = vsub.f32 %v898, %v900
    %v903 = vsub.f32 %v899, %v901
    %v904 = vsub.f32 %v880, %v888
    %v905 = vsub.f32 %v881, %v889
    %v906 = vadd.f32 %v902, 32.0
    %v907 = vadd.f32 %v903, 32.0
    %v908 = vrsqrt.pop %v906
    %v909 = vrsqrt.pop %v907
    %v910 = vmul.f32 %v904, %v908
    %v911 = vmul.f32 %v905, %v909
    %v912 = vmul.f32 %v910, %v224
    %v913 = vmul.f32 %v911, %v224
    %v914 = vadd.f32 %v912, %v232
    %v915 = vadd.f32 %v913, %v232
    %v916 = vld [vmem:[%s12] sm:$0xff]
    %v917 = vld [vmem:[%s12 + $0x8] sm:$0xff]
    %v918 = vld [vmem:[%s12 + $0x10] sm:$0xff]
    %v919 = vld [vmem:[%s12 + $0x18] sm:$0xff]
    %v920 = vld [vmem:[%s13] sm:$0x1]
    %v922 = vlaneseq
    %v923 = vshrl.u32 %v922, 7
    %v924 = vsub.s32 0, %v923
    %v925 = vrot.slane %v920, %v924
    %v928 = vsel %vm188, %v914, 0
    %v931 = vsel %vm188, %v915, 0
    %933 = vmatprep.subr.mxu0 0.0
    %934 = vmatpush1.msra.mxu0 %v916
    %935 = vmatprep.subr.mxu0 0.0
    %936 = vmatpush1.msra.mxu0 %v917
    %937 = vmatprep.subr.mxu0 0.0
    %938 = vmatpush1.msra.mxu0 %v918
    %939 = vmatprep.subr.mxu0 0.0
    %940 = vmatpush1.msra.mxu0 %v919
    %941 = vmatprep.subr.mxu0 0.0
    %942 = vmatpush1.msra.mxu0 0.0
    %943 = vmatprep.subr.mxu0 0.0
    %944 = vmatpush1.msra.mxu0 0.0
    %945 = vmatprep.subr.mxu0 0.0
    %946 = vmatpush1.msra.mxu0 0.0
    %947 = vmatprep.subr.mxu0 0.0
    %948 = vmatpush1.msra.mxu0 0.0
    %949 = vmatprep.subr.mxu0 0.0
    %950 = vmatpush1.msra.mxu0 0.0
    %951 = vmatprep.subr.mxu0 0.0
    %952 = vmatpush1.msra.mxu0 0.0
    %953 = vmatprep.subr.mxu0 0.0
    %954 = vmatpush1.msra.mxu0 0.0
    %955 = vmatprep.subr.mxu0 0.0
    %956 = vmatpush1.msra.mxu0 0.0
    %957 = vmatprep.subr.mxu0 0.0
    %958 = vmatpush1.msra.mxu0 0.0
    %959 = vmatprep.subr.mxu0 0.0
    %960 = vmatpush1.msra.mxu0 0.0
    %961 = vmatprep.subr.mxu0 0.0
    %962 = vmatpush1.msra.mxu0 0.0
    %963 = vmatprep.subr.mxu0 0.0
    %964 = vmatpush1.msra.mxu0 0.0
    %965 = vmatprep.subr.mxu0 0.0
    %966 = vmatpush1.msra.mxu0 0.0
    %967 = vmatprep.subr.mxu0 0.0
    %968 = vmatpush1.msra.mxu0 0.0
    %969 = vmatprep.subr.mxu0 0.0
    %970 = vmatpush1.msra.mxu0 0.0
    %971 = vmatprep.subr.mxu0 0.0
    %972 = vmatpush1.msra.mxu0 0.0
    %973 = vmatprep.subr.mxu0 0.0
    %974 = vmatpush1.msra.mxu0 0.0
    %975 = vmatprep.subr.mxu0 0.0
    %976 = vmatpush1.msra.mxu0 0.0
    %977 = vmatprep.subr.mxu0 0.0
    %978 = vmatpush1.msra.mxu0 0.0
    %979 = vmatprep.subr.mxu0 0.0
    %980 = vmatpush1.msra.mxu0 0.0
    %981 = vmatprep.subr.mxu0 0.0
    %982 = vmatpush1.msra.mxu0 0.0
    %983 = vmatprep.subr.mxu0 0.0
    %984 = vmatpush1.msra.mxu0 0.0
    %985 = vmatprep.subr.mxu0 0.0
    %986 = vmatpush1.msra.mxu0 0.0
    %987 = vmatprep.subr.mxu0 0.0
    %988 = vmatpush1.msra.mxu0 0.0
    %989 = vmatprep.subr.mxu0 0.0
    %990 = vmatpush1.msra.mxu0 0.0
    %991 = vmatprep.subr.mxu0 0.0
    %992 = vmatpush1.msra.mxu0 0.0
    %993 = vmatprep.subr.mxu0 0.0
    %994 = vmatpush1.msra.mxu0 0.0
    %995 = vmatprep.subr.mxu0 0.0
    %996 = vmatpush1.msra.mxu0 0.0
    %997 = vmatprep.mubr.f32.mxu0 0.0
    %998 = vmatmul.mubr.f32.gmra.mrb[0].mxu0 %v928
    %v999 = vpop.f32.mrb[0].mxu0
    %v1000 = vadd.f32 %v925, %v999
    %v1001 = vpop.f32.mrb[0].mxu0
    %1002 = vmatprep.mubr.f32.mxu0 0.0
    %1003 = vmatmul.mubr.f32.gmra.mrb[0].mxu0 %v931
    %v1004 = vpop.f32.mrb[0].mxu0
    %v1005 = vadd.f32 %v925, %v1004
    %v1006 = vpop.f32.mrb[0].mxu0
    %1007 = vdwg.mxu0
    %v1008 = vmax.f32 %v1000, 0.0
    %v1009 = vmax.f32 %v1005, 0.0
    %v1010 = vld [vmem:[%s14] sm:$0xff]
    %v1011 = vld [vmem:[%s14 + $0x8] sm:$0xff]
    %v1012 = vld [vmem:[%s14 + $0x10] sm:$0xff]
    %v1013 = vld [vmem:[%s14 + $0x18] sm:$0xff]
    %v1014 = vld [vmem:[%s14 + $0x20] sm:$0xff]
    %v1015 = vld [vmem:[%s14 + $0x28] sm:$0xff]
    %v1016 = vld [vmem:[%s14 + $0x30] sm:$0xff]
    %v1017 = vld [vmem:[%s14 + $0x38] sm:$0xff]
    %v1019 = vsel %vm86, %v1008, 0
    %v1022 = vsel %vm86, %v1009, 0
    %1024 = vmatprep.subr.mxu0 0.0
    %1025 = vmatpush1.msra.mxu0 %v1010
    %1026 = vmatprep.subr.mxu0 0.0
    %1027 = vmatpush1.msra.mxu0 %v1011
    %1028 = vmatprep.subr.mxu0 0.0
    %1029 = vmatpush1.msra.mxu0 %v1012
    %1030 = vmatprep.subr.mxu0 0.0
    %1031 = vmatpush1.msra.mxu0 %v1013
    %1032 = vmatprep.subr.mxu0 0.0
    %1033 = vmatpush1.msra.mxu0 %v1014
    %1034 = vmatprep.subr.mxu0 0.0
    %1035 = vmatpush1.msra.mxu0 %v1015
    %1036 = vmatprep.subr.mxu0 0.0
    %1037 = vmatpush1.msra.mxu0 %v1016
    %1038 = vmatprep.subr.mxu0 0.0
    %1039 = vmatpush1.msra.mxu0 %v1017
    %1040 = vmatprep.subr.mxu0 0.0
    %1041 = vmatpush1.msra.mxu0 0.0
    %1042 = vmatprep.subr.mxu0 0.0
    %1043 = vmatpush1.msra.mxu0 0.0
    %1044 = vmatprep.subr.mxu0 0.0
    %1045 = vmatpush1.msra.mxu0 0.0
    %1046 = vmatprep.subr.mxu0 0.0
    %1047 = vmatpush1.msra.mxu0 0.0
    %1048 = vmatprep.subr.mxu0 0.0
    %1049 = vmatpush1.msra.mxu0 0.0
    %1050 = vmatprep.subr.mxu0 0.0
    %1051 = vmatpush1.msra.mxu0 0.0
    %1052 = vmatprep.subr.mxu0 0.0
    %1053 = vmatpush1.msra.mxu0 0.0
    %1054 = vmatprep.subr.mxu0 0.0
    %1055 = vmatpush1.msra.mxu0 0.0
    %1056 = vmatprep.subr.mxu0 0.0
    %1057 = vmatpush1.msra.mxu0 0.0
    %1058 = vmatprep.subr.mxu0 0.0
    %1059 = vmatpush1.msra.mxu0 0.0
    %1060 = vmatprep.subr.mxu0 0.0
    %1061 = vmatpush1.msra.mxu0 0.0
    %1062 = vmatprep.subr.mxu0 0.0
    %1063 = vmatpush1.msra.mxu0 0.0
    %1064 = vmatprep.subr.mxu0 0.0
    %1065 = vmatpush1.msra.mxu0 0.0
    %1066 = vmatprep.subr.mxu0 0.0
    %1067 = vmatpush1.msra.mxu0 0.0
    %1068 = vmatprep.subr.mxu0 0.0
    %1069 = vmatpush1.msra.mxu0 0.0
    %1070 = vmatprep.subr.mxu0 0.0
    %1071 = vmatpush1.msra.mxu0 0.0
    %1072 = vmatprep.subr.mxu0 0.0
    %1073 = vmatpush1.msra.mxu0 0.0
    %1074 = vmatprep.subr.mxu0 0.0
    %1075 = vmatpush1.msra.mxu0 0.0
    %1076 = vmatprep.subr.mxu0 0.0
    %1077 = vmatpush1.msra.mxu0 0.0
    %1078 = vmatprep.subr.mxu0 0.0
    %1079 = vmatpush1.msra.mxu0 0.0
    %1080 = vmatprep.subr.mxu0 0.0
    %1081 = vmatpush1.msra.mxu0 0.0
    %1082 = vmatprep.subr.mxu0 0.0
    %1083 = vmatpush1.msra.mxu0 0.0
    %1084 = vmatprep.subr.mxu0 0.0
    %1085 = vmatpush1.msra.mxu0 0.0
    %1086 = vmatprep.subr.mxu0 0.0
    %1087 = vmatpush1.msra.mxu0 0.0
    %1088 = vmatprep.mubr.f32.mxu0 0.0
    %1089 = vmatmul.mubr.f32.gmra.mrb[0].mxu0 %v1019
    %v1090 = vpop.f32.mrb[0].mxu0
    %v1091 = vadd.f32 0.0, %v1090
    %v1092 = vpop.f32.mrb[0].mxu0
    %1093 = vmatprep.mubr.f32.mxu0 0.0
    %1094 = vmatmul.mubr.f32.gmra.mrb[0].mxu0 %v1022
    %v1095 = vpop.f32.mrb[0].mxu0
    %v1096 = vadd.f32 0.0, %v1095
    %v1097 = vpop.f32.mrb[0].mxu0
    %1098 = vdwg.mxu0
    %v1099 = vadd.f32 %v880, %v1091
    %v1100 = vadd.f32 %v881, %v1096
    %v1101 = vld [vmem:[%s15] sm:$0x1]
    %v1103 = vlaneseq
    %v1104 = vshrl.u32 %v1103, 7
    %v1105 = vsub.s32 0, %v1104
    %v1106 = vrot.slane %v1101, %v1105
    %v1108 = vadd.f32 %v1099, %v1106
    %v1109 = vadd.f32 %v1100, %v1106
    %s1110 = scalar_lea.vmem %s6, 1
    %v1111 = vld [vmem:[%s1110] sm:$0x1]
    %s1112 = scalar_lea.vmem %s7, 1
    %v1113 = vld [vmem:[%s1112] sm:$0x1]
    %v1114 = vsel %vm188, %v1108, 0.0
    %1115 = vadd.xlane.f32.xlu0 %v1114
    %v1116 = vpop.xlane.xlu0 %1115
    %v1117 = vsel %vm188, %v1109, 0.0
    %1118 = vadd.xlane.f32.xlu0 %v1117
    %v1119 = vpop.xlane.xlu0 %1118
    %v1120 = vmul.f32 %v1116, %v195
    %v1121 = vmul.f32 %v1119, %v195
    %v1122 = vmul.f32 %v1108, %v1108
    %v1123 = vmul.f32 %v1109, %v1109
    %v1124 = vsel %vm188, %v1122, 0.0
    %1125 = vadd.xlane.f32.xlu0 %v1124
    %v1126 = vpop.xlane.xlu0 %1125
    %v1127 = vsel %vm188, %v1123, 0.0
    %1128 = vadd.xlane.f32.xlu0 %v1127
    %v1129 = vpop.xlane.xlu0 %1128
    %v1130 = vmul.f32 %v1126, %v195
    %v1131 = vmul.f32 %v1129, %v195
    %v1132 = vmul.f32 %v1120, %v1120
    %v1133 = vmul.f32 %v1121, %v1121
    %v1134 = vsub.f32 %v1130, %v1132
    %v1135 = vsub.f32 %v1131, %v1133
    %v1136 = vsub.f32 %v1108, %v1120
    %v1137 = vsub.f32 %v1109, %v1121
    %v1138 = vadd.f32 %v1134, 32.0
    %v1139 = vadd.f32 %v1135, 32.0
    %v1140 = vrsqrt.pop %v1138
    %v1141 = vrsqrt.pop %v1139
    %v1142 = vmul.f32 %v1136, %v1140
    %v1143 = vmul.f32 %v1137, %v1141
    %v1145 = vlaneseq
    %v1146 = vshrl.u32 %v1145, 7
    %v1147 = vsub.s32 0, %v1146
    %v1148 = vrot.slane %v1111, %v1147
    %v1150 = vmul.f32 %v1142, %v1148
    %v1151 = vmul.f32 %v1143, %v1148
    %v1153 = vlaneseq
    %v1154 = vshrl.u32 %v1153, 7
    %v1155 = vsub.s32 0, %v1154
    %v1156 = vrot.slane %v1113, %v1155
    %v1158 = vadd.f32 %v1150, %v1156
    %v1159 = vadd.f32 %v1151, %v1156
    %s1160 = scalar_lea.vmem %s8, 32
    %v1161 = vld [vmem:[%s1160] sm:$0xff]
    %v1162 = vld [vmem:[%s1160 + $0x8] sm:$0xff]
    %v1163 = vld [vmem:[%s1160 + $0x10] sm:$0xff]
    %v1164 = vld [vmem:[%s1160 + $0x18] sm:$0xff]
    %s1165 = scalar_lea.vmem %s9, 1
    %v1166 = vld [vmem:[%s1165] sm:$0x1]
    %v1168 = vlaneseq
    %v1169 = vshrl.u32 %v1168, 7
    %v1170 = vsub.s32 0, %v1169
    %v1171 = vrot.slane %v1166, %v1170
    %v1174 = vsel %vm188, %v1158, 0
    %v1177 = vsel %vm188, %v1159, 0
    %1179 = vmatprep.subr.mxu0 0.0
    %1180 = vmatpush1.msra.mxu0 %v1161
    %1181 = vmatprep.subr.mxu0 0.0
    %1182 = vmatpush1.msra.mxu0 %v1162
    %1183 = vmatprep.subr.mxu0 0.0
    %1184 = vmatpush1.msra.mxu0 %v1163
    %1185 = vmatprep.subr.mxu0 0.0
    %1186 = vmatpush1.msra.mxu0 %v1164
    %1187 = vmatprep.subr.mxu0 0.0
    %1188 = vmatpush1.msra.mxu0 0.0
    %1189 = vmatprep.subr.mxu0 0.0
    %1190 = vmatpush1.msra.mxu0 0.0
    %1191 = vmatprep.subr.mxu0 0.0
    %1192 = vmatpush1.msra.mxu0 0.0
    %1193 = vmatprep.subr.mxu0 0.0
    %1194 = vmatpush1.msra.mxu0 0.0
    %1195 = vmatprep.subr.mxu0 0.0
    %1196 = vmatpush1.msra.mxu0 0.0
    %1197 = vmatprep.subr.mxu0 0.0
    %1198 = vmatpush1.msra.mxu0 0.0
    %1199 = vmatprep.subr.mxu0 0.0
    %1200 = vmatpush1.msra.mxu0 0.0
    %1201 = vmatprep.subr.mxu0 0.0
    %1202 = vmatpush1.msra.mxu0 0.0
    %1203 = vmatprep.subr.mxu0 0.0
    %1204 = vmatpush1.msra.mxu0 0.0
    %1205 = vmatprep.subr.mxu0 0.0
    %1206 = vmatpush1.msra.mxu0 0.0
    %1207 = vmatprep.subr.mxu0 0.0
    %1208 = vmatpush1.msra.mxu0 0.0
    %1209 = vmatprep.subr.mxu0 0.0
    %1210 = vmatpush1.msra.mxu0 0.0
    %1211 = vmatprep.subr.mxu0 0.0
    %1212 = vmatpush1.msra.mxu0 0.0
    %1213 = vmatprep.subr.mxu0 0.0
    %1214 = vmatpush1.msra.mxu0 0.0
    %1215 = vmatprep.subr.mxu0 0.0
    %1216 = vmatpush1.msra.mxu0 0.0
    %1217 = vmatprep.subr.mxu0 0.0
    %1218 = vmatpush1.msra.mxu0 0.0
    %1219 = vmatprep.subr.mxu0 0.0
    %1220 = vmatpush1.msra.mxu0 0.0
    %1221 = vmatprep.subr.mxu0 0.0
    %1222 = vmatpush1.msra.mxu0 0.0
    %1223 = vmatprep.subr.mxu0 0.0
    %1224 = vmatpush1.msra.mxu0 0.0
    %1225 = vmatprep.subr.mxu0 0.0
    %1226 = vmatpush1.msra.mxu0 0.0
    %1227 = vmatprep.subr.mxu0 0.0
    %1228 = vmatpush1.msra.mxu0 0.0
    %1229 = vmatprep.subr.mxu0 0.0
    %1230 = vmatpush1.msra.mxu0 0.0
    %1231 = vmatprep.subr.mxu0 0.0
    %1232 = vmatpush1.msra.mxu0 0.0
    %1233 = vmatprep.subr.mxu0 0.0
    %1234 = vmatpush1.msra.mxu0 0.0
    %1235 = vmatprep.subr.mxu0 0.0
    %1236 = vmatpush1.msra.mxu0 0.0
    %1237 = vmatprep.subr.mxu0 0.0
    %1238 = vmatpush1.msra.mxu0 0.0
    %1239 = vmatprep.subr.mxu0 0.0
    %1240 = vmatpush1.msra.mxu0 0.0
    %1241 = vmatprep.subr.mxu0 0.0
    %1242 = vmatpush1.msra.mxu0 0.0
    %1243 = vmatprep.mubr.f32.mxu0 0.0
    %1244 = vmatmul.mubr.f32.gmra.mrb[0].mxu0 %v1174
    %v1245 = vpop.f32.mrb[0].mxu0
    %v1246 = vadd.f32 %v1171, %v1245
    %v1247 = vpop.f32.mrb[0].mxu0
    %1248 = vmatprep.mubr.f32.mxu0 0.0
    %1249 = vmatmul.mubr.f32.gmra.mrb[0].mxu0 %v1177
    %v1250 = vpop.f32.mrb[0].mxu0
    %v1251 = vadd.f32 %v1171, %v1250
    %v1252 = vpop.f32.mrb[0].mxu0
    %1253 = vdwg.mxu0
    %v1254 = vmul.f32 %v1246, %v176
    %v1255 = vmul.f32 %v1246, %v177
    %v1256 = vmul.f32 %v1246, %v178
    %v1257 = vmul.f32 %v1246, %v179
    %v1258 = vmul.f32 %v1251, %v180
    %v1259 = vmul.f32 %v1251, %v181
    %v1260 = vmul.f32 %v1251, %v182
    %v1261 = vmul.f32 %v1251, %v183
    %1264 = vrot.lane.b32.xlu0 %v1246, 96
    %v1265 = vpop.permute.xlu0 %1264
    %1266 = vrot.lane.b32.xlu0 %v1251, 96
    %v1267 = vpop.permute.xlu0 %1266
    %v1269 = vsel %vm188, %v1254, 0
    %v1272 = vsel %vm188, %v1255, 0
    %v1275 = vsel %vm188, %v1256, 0
    %v1278 = vsel %vm188, %v1257, 0
    %v1281 = vsel %vm188, %v1258, 0
    %v1284 = vsel %vm188, %v1259, 0
    %v1287 = vsel %vm188, %v1260, 0
    %v1290 = vsel %vm188, %v1261, 0
    %v1292 = vsel %vm188, %v1265, 0
    %v1294 = vsel %vm188, %v1267, 0
    %1296 = vmatprep.subr.mxu0 0.0
    %1297 = vmatpush1.xpose.msra.mxu0 %v1292
    %1298 = vmatprep.subr.mxu0 0.0
    %1299 = vmatpush1.xpose.msra.mxu0 %v1294
    %1300 = vmatprep.subr.mxu0 0.0
    %1301 = vmatpush1.xpose.msra.mxu0 0.0
    %1302 = vmatprep.subr.mxu0 0.0
    %1303 = vmatpush1.xpose.msra.mxu0 0.0
    %1304 = vmatprep.subr.mxu0 0.0
    %1305 = vmatpush1.xpose.msra.mxu0 0.0
    %1306 = vmatprep.subr.mxu0 0.0
    %1307 = vmatpush1.xpose.msra.mxu0 0.0
    %1308 = vmatprep.subr.mxu0 0.0
    %1309 = vmatpush1.xpose.msra.mxu0 0.0
    %1310 = vmatprep.subr.mxu0 0.0
    %1311 = vmatpush1.xpose.msra.mxu0 0.0
    %1312 = vmatprep.subr.mxu0 0.0
    %1313 = vmatpush1.xpose.msra.mxu0 0.0
    %1314 = vmatprep.subr.mxu0 0.0
    %1315 = vmatpush1.xpose.msra.mxu0 0.0
    %1316 = vmatprep.subr.mxu0 0.0
    %1317 = vmatpush1.xpose.msra.mxu0 0.0
    %1318 = vmatprep.subr.mxu0 0.0
    %1319 = vmatpush1.xpose.msra.mxu0 0.0
    %1320 = vmatprep.subr.mxu0 0.0
    %1321 = vmatpush1.xpose.msra.mxu0 0.0
    %1322 = vmatprep.subr.mxu0 0.0
    %1323 = vmatpush1.xpose.msra.mxu0 0.0
    %1324 = vmatprep.subr.mxu0 0.0
    %1325 = vmatpush1.xpose.msra.mxu0 0.0
    %1326 = vmatprep.subr.mxu0 0.0
    %1327 = vmatpush1.xpose.msra.mxu0 0.0
    %1328 = vmatprep.subr.mxu0 0.0
    %1329 = vmatpush1.xpose.msra.mxu0 0.0
    %1330 = vmatprep.subr.mxu0 0.0
    %1331 = vmatpush1.xpose.msra.mxu0 0.0
    %1332 = vmatprep.subr.mxu0 0.0
    %1333 = vmatpush1.xpose.msra.mxu0 0.0
    %1334 = vmatprep.subr.mxu0 0.0
    %1335 = vmatpush1.xpose.msra.mxu0 0.0
    %1336 = vmatprep.subr.mxu0 0.0
    %1337 = vmatpush1.xpose.msra.mxu0 0.0
    %1338 = vmatprep.subr.mxu0 0.0
    %1339 = vmatpush1.xpose.msra.mxu0 0.0
    %1340 = vmatprep.subr.mxu0 0.0
    %1341 = vmatpush1.xpose.msra.mxu0 0.0
    %1342 = vmatprep.subr.mxu0 0.0
    %1343 = vmatpush1.xpose.msra.mxu0 0.0
    %1344 = vmatprep.subr.mxu0 0.0
    %1345 = vmatpush1.xpose.msra.mxu0 0.0
    %1346 = vmatprep.subr.mxu0 0.0
    %1347 = vmatpush1.xpose.msra.mxu0 0.0
    %1348 = vmatprep.subr.mxu0 0.0
    %1349 = vmatpush1.xpose.msra.mxu0 0.0
    %1350 = vmatprep.subr.mxu0 0.0
    %1351 = vmatpush1.xpose.msra.mxu0 0.0
    %1352 = vmatprep.subr.mxu0 0.0
    %1353 = vmatpush1.xpose.msra.mxu0 0.0
    %1354 = vmatprep.subr.mxu0 0.0
    %1355 = vmatpush1.xpose.msra.mxu0 0.0
    %1356 = vmatprep.subr.mxu0 0.0
    %1357 = vmatpush1.xpose.msra.mxu0 0.0
    %1358 = vmatprep.subr.mxu0 0.0
    %1359 = vmatpush1.xpose.msra.mxu0 0.0
    %1360 = vmatprep.mubr.f32.mxu0 0.0
    %1361 = vmatmul.mubr.f32.gmra.mrb[0].mxu0 %v1269
    %v1362 = vpop.f32.mrb[0].mxu0
    %v1363 = vadd.f32 %v168, %v1362
    %v1364 = vpop.f32.mrb[0].mxu0
    %1365 = vmatprep.mubr.f32.mxu0 0.0
    %1366 = vmatmul.mubr.f32.gmra.mrb[0].mxu0 %v1272
    %v1367 = vpop.f32.mrb[0].mxu0
    %v1368 = vadd.f32 %v169, %v1367
    %v1369 = vpop.f32.mrb[0].mxu0
    %1370 = vmatprep.mubr.f32.mxu0 0.0
    %1371 = vmatmul.mubr.f32.gmra.mrb[0].mxu0 %v1275
    %v1372 = vpop.f32.mrb[0].mxu0
    %v1373 = vadd.f32 %v170, %v1372
    %v1374 = vpop.f32.mrb[0].mxu0
    %1375 = vmatprep.mubr.f32.mxu0 0.0
    %1376 = vmatmul.mubr.f32.gmra.mrb[0].mxu0 %v1278
    %v1377 = vpop.f32.mrb[0].mxu0
    %v1378 = vadd.f32 %v171, %v1377
    %v1379 = vpop.f32.mrb[0].mxu0
    %1380 = vmatprep.mubr.f32.mxu0 0.0
    %1381 = vmatmul.mubr.f32.gmra.mrb[0].mxu0 %v1281
    %v1382 = vpop.f32.mrb[0].mxu0
    %v1383 = vadd.f32 %v172, %v1382
    %v1384 = vpop.f32.mrb[0].mxu0
    %1385 = vmatprep.mubr.f32.mxu0 0.0
    %1386 = vmatmul.mubr.f32.gmra.mrb[0].mxu0 %v1284
    %v1387 = vpop.f32.mrb[0].mxu0
    %v1388 = vadd.f32 %v173, %v1387
    %v1389 = vpop.f32.mrb[0].mxu0
    %1390 = vmatprep.mubr.f32.mxu0 0.0
    %1391 = vmatmul.mubr.f32.gmra.mrb[0].mxu0 %v1287
    %v1392 = vpop.f32.mrb[0].mxu0
    %v1393 = vadd.f32 %v174, %v1392
    %v1394 = vpop.f32.mrb[0].mxu0
    %1395 = vmatprep.mubr.f32.mxu0 0.0
    %1396 = vmatmul.mubr.f32.gmra.mrb[0].mxu0 %v1290
    %v1397 = vpop.f32.mrb[0].mxu0
    %v1398 = vadd.f32 %v175, %v1397
    %v1399 = vpop.f32.mrb[0].mxu0
    %1400 = vdwg.mxu0
    %v1401 = vsel %vm475, %v1363, -inf
    %1402 = vmax.xlane.f32.xlu0 %v1401
    %v1403 = vpop.xlane.xlu0 %1402
    %v1404 = vsel %vm475, %v1368, -inf
    %1405 = vmax.xlane.f32.xlu0 %v1404
    %v1406 = vpop.xlane.xlu0 %1405
    %v1407 = vsel %vm475, %v1373, -inf
    %1408 = vmax.xlane.f32.xlu0 %v1407
    %v1409 = vpop.xlane.xlu0 %1408
    %v1410 = vsel %vm475, %v1378, -inf
    %1411 = vmax.xlane.f32.xlu0 %v1410
    %v1412 = vpop.xlane.xlu0 %1411
    %v1413 = vsel %vm475, %v1383, -inf
    %1414 = vmax.xlane.f32.xlu0 %v1413
    %v1415 = vpop.xlane.xlu0 %1414
    %v1416 = vsel %vm475, %v1388, -inf
    %1417 = vmax.xlane.f32.xlu0 %v1416
    %v1418 = vpop.xlane.xlu0 %1417
    %v1419 = vsel %vm475, %v1393, -inf
    %1420 = vmax.xlane.f32.xlu0 %v1419
    %v1421 = vpop.xlane.xlu0 %1420
    %v1422 = vsel %vm475, %v1398, -inf
    %1423 = vmax.xlane.f32.xlu0 %v1422
    %v1424 = vpop.xlane.xlu0 %1423
    %v1425 = vsub.f32 %v1363, %v1403
    %v1426 = vsub.f32 %v1368, %v1406
    %v1427 = vsub.f32 %v1373, %v1409
    %v1428 = vsub.f32 %v1378, %v1412
    %v1429 = vsub.f32 %v1383, %v1415
    %v1430 = vsub.f32 %v1388, %v1418
    %v1431 = vsub.f32 %v1393, %v1421
    %v1432 = vsub.f32 %v1398, %v1424
    %v1433 = vmul.f32 %v1425, 1.442695
    %v1434 = vpow.pop %v1433
    %v1435 = vmul.f32 %v1426, 1.442695
    %v1436 = vpow.pop %v1435
    %v1437 = vmul.f32 %v1427, 1.442695
    %v1438 = vpow.pop %v1437
    %v1439 = vmul.f32 %v1428, 1.442695
    %v1440 = vpow.pop %v1439
    %v1441 = vmul.f32 %v1429, 1.442695
    %v1442 = vpow.pop %v1441
    %v1443 = vmul.f32 %v1430, 1.442695
    %v1444 = vpow.pop %v1443
    %v1445 = vmul.f32 %v1431, 1.442695
    %v1446 = vpow.pop %v1445
    %v1447 = vmul.f32 %v1432, 1.442695
    %v1448 = vpow.pop %v1447
    %v1449 = vsel %vm475, %v1434, 0.0
    %1450 = vadd.xlane.f32.xlu0 %v1449
    %v1451 = vpop.xlane.xlu0 %1450
    %v1452 = vsel %vm475, %v1436, 0.0
    %1453 = vadd.xlane.f32.xlu0 %v1452
    %v1454 = vpop.xlane.xlu0 %1453
    %v1455 = vsel %vm475, %v1438, 0.0
    %1456 = vadd.xlane.f32.xlu0 %v1455
    %v1457 = vpop.xlane.xlu0 %1456
    %v1458 = vsel %vm475, %v1440, 0.0
    %1459 = vadd.xlane.f32.xlu0 %v1458
    %v1460 = vpop.xlane.xlu0 %1459
    %v1461 = vsel %vm475, %v1442, 0.0
    %1462 = vadd.xlane.f32.xlu0 %v1461
    %v1463 = vpop.xlane.xlu0 %1462
    %v1464 = vsel %vm475, %v1444, 0.0
    %1465 = vadd.xlane.f32.xlu0 %v1464
    %v1466 = vpop.xlane.xlu0 %1465
    %v1467 = vsel %vm475, %v1446, 0.0
    %1468 = vadd.xlane.f32.xlu0 %v1467
    %v1469 = vpop.xlane.xlu0 %1468
    %v1470 = vsel %vm475, %v1448, 0.0
    %1471 = vadd.xlane.f32.xlu0 %v1470
    %v1472 = vpop.xlane.xlu0 %1471
    %v1473 = vrcp.pop %v1451
    %v1474 = vrcp.pop %v1454
    %v1475 = vrcp.pop %v1457
    %v1476 = vrcp.pop %v1460
    %v1477 = vrcp.pop %v1463
    %v1478 = vrcp.pop %v1466
    %v1479 = vrcp.pop %v1469
    %v1480 = vrcp.pop %v1472
    %v1481 = vmul.f32 %v1434, %v1473
    %v1482 = vmul.f32 %v1436, %v1474
    %v1483 = vmul.f32 %v1438, %v1475
    %v1484 = vmul.f32 %v1440, %v1476
    %v1485 = vmul.f32 %v1442, %v1477
    %v1486 = vmul.f32 %v1444, %v1478
    %v1487 = vmul.f32 %v1446, %v1479
    %v1488 = vmul.f32 %v1448, %v1480
    %1489 = vrot.lane.b32.xlu0 %v1246, 64
    %v1490 = vpop.permute.xlu0 %1489
    %1491 = vrot.lane.b32.xlu0 %v1251, 64
    %v1492 = vpop.permute.xlu0 %1491
    %v1496 = vsel %vm475, %v1481, 0
    %v1499 = vsel %vm475, %v1482, 0
    %v1502 = vsel %vm475, %v1483, 0
    %v1505 = vsel %vm475, %v1484, 0
    %v1508 = vsel %vm475, %v1485, 0
    %v1511 = vsel %vm475, %v1486, 0
    %v1514 = vsel %vm475, %v1487, 0
    %v1517 = vsel %vm475, %v1488, 0
    %1519 = vmatprep.subr.mxu0 0.0
    %1520 = vmatpush1.msra.mxu0 %v1490
    %1521 = vmatprep.subr.mxu0 0.0
    %1522 = vmatpush1.msra.mxu0 %v1492
    %1523 = vmatprep.subr.mxu0 0.0
    %1524 = vmatpush1.msra.mxu0 0.0
    %1525 = vmatprep.subr.mxu0 0.0
    %1526 = vmatpush1.msra.mxu0 0.0
    %1527 = vmatprep.subr.mxu0 0.0
    %1528 = vmatpush1.msra.mxu0 0.0
    %1529 = vmatprep.subr.mxu0 0.0
    %1530 = vmatpush1.msra.mxu0 0.0
    %1531 = vmatprep.subr.mxu0 0.0
    %1532 = vmatpush1.msra.mxu0 0.0
    %1533 = vmatprep.subr.mxu0 0.0
    %1534 = vmatpush1.msra.mxu0 0.0
    %1535 = vmatprep.subr.mxu0 0.0
    %1536 = vmatpush1.msra.mxu0 0.0
    %1537 = vmatprep.subr.mxu0 0.0
    %1538 = vmatpush1.msra.mxu0 0.0
    %1539 = vmatprep.subr.mxu0 0.0
    %1540 = vmatpush1.msra.mxu0 0.0
    %1541 = vmatprep.subr.mxu0 0.0
    %1542 = vmatpush1.msra.mxu0 0.0
    %1543 = vmatprep.subr.mxu0 0.0
    %1544 = vmatpush1.msra.mxu0 0.0
    %1545 = vmatprep.subr.mxu0 0.0
    %1546 = vmatpush1.msra.mxu0 0.0
    %1547 = vmatprep.subr.mxu0 0.0
    %1548 = vmatpush1.msra.mxu0 0.0
    %1549 = vmatprep.subr.mxu0 0.0
    %1550 = vmatpush1.msra.mxu0 0.0
    %1551 = vmatprep.subr.mxu0 0.0
    %1552 = vmatpush1.msra.mxu0 0.0
    %1553 = vmatprep.subr.mxu0 0.0
    %1554 = vmatpush1.msra.mxu0 0.0
    %1555 = vmatprep.subr.mxu0 0.0
    %1556 = vmatpush1.msra.mxu0 0.0
    %1557 = vmatprep.subr.mxu0 0.0
    %1558 = vmatpush1.msra.mxu0 0.0
    %1559 = vmatprep.subr.mxu0 0.0
    %1560 = vmatpush1.msra.mxu0 0.0
    %1561 = vmatprep.subr.mxu0 0.0
    %1562 = vmatpush1.msra.mxu0 0.0
    %1563 = vmatprep.subr.mxu0 0.0
    %1564 = vmatpush1.msra.mxu0 0.0
    %1565 = vmatprep.subr.mxu0 0.0
    %1566 = vmatpush1.msra.mxu0 0.0
    %1567 = vmatprep.subr.mxu0 0.0
    %1568 = vmatpush1.msra.mxu0 0.0
    %1569 = vmatprep.subr.mxu0 0.0
    %1570 = vmatpush1.msra.mxu0 0.0
    %1571 = vmatprep.subr.mxu0 0.0
    %1572 = vmatpush1.msra.mxu0 0.0
    %1573 = vmatprep.subr.mxu0 0.0
    %1574 = vmatpush1.msra.mxu0 0.0
    %1575 = vmatprep.subr.mxu0 0.0
    %1576 = vmatpush1.msra.mxu0 0.0
    %1577 = vmatprep.subr.mxu0 0.0
    %1578 = vmatpush1.msra.mxu0 0.0
    %1579 = vmatprep.subr.mxu0 0.0
    %1580 = vmatpush1.msra.mxu0 0.0
    %1581 = vmatprep.subr.mxu0 0.0
    %1582 = vmatpush1.msra.mxu0 0.0
    %1583 = vmatprep.mubr.f32.mxu0 0.0
    %1584 = vmatmul.mubr.f32.gmra.mrb[0].mxu0 %v1496
    %v1585 = vpop.f32.mrb[0].mxu0
    %v1586 = vadd.f32 0.0, %v1585
    %v1587 = vpop.f32.mrb[0].mxu0
    %1588 = vmatprep.mubr.f32.mxu0 0.0
    %1589 = vmatmul.mubr.f32.gmra.mrb[0].mxu0 %v1499
    %v1590 = vpop.f32.mrb[0].mxu0
    %v1591 = vadd.f32 0.0, %v1590
    %v1592 = vpop.f32.mrb[0].mxu0
    %1593 = vmatprep.mubr.f32.mxu0 0.0
    %1594 = vmatmul.mubr.f32.gmra.mrb[0].mxu0 %v1502
    %v1595 = vpop.f32.mrb[0].mxu0
    %v1596 = vadd.f32 0.0, %v1595
    %v1597 = vpop.f32.mrb[0].mxu0
    %1598 = vmatprep.mubr.f32.mxu0 0.0
    %1599 = vmatmul.mubr.f32.gmra.mrb[0].mxu0 %v1505
    %v1600 = vpop.f32.mrb[0].mxu0
    %v1601 = vadd.f32 0.0, %v1600
    %v1602 = vpop.f32.mrb[0].mxu0
    %1603 = vmatprep.mubr.f32.mxu0 0.0
    %1604 = vmatmul.mubr.f32.gmra.mrb[0].mxu0 %v1508
    %v1605 = vpop.f32.mrb[0].mxu0
    %v1606 = vadd.f32 0.0, %v1605
    %v1607 = vpop.f32.mrb[0].mxu0
    %1608 = vmatprep.mubr.f32.mxu0 0.0
    %1609 = vmatmul.mubr.f32.gmra.mrb[0].mxu0 %v1511
    %v1610 = vpop.f32.mrb[0].mxu0
    %v1611 = vadd.f32 0.0, %v1610
    %v1612 = vpop.f32.mrb[0].mxu0
    %1613 = vmatprep.mubr.f32.mxu0 0.0
    %1614 = vmatmul.mubr.f32.gmra.mrb[0].mxu0 %v1514
    %v1615 = vpop.f32.mrb[0].mxu0
    %v1616 = vadd.f32 0.0, %v1615
    %v1617 = vpop.f32.mrb[0].mxu0
    %1618 = vmatprep.mubr.f32.mxu0 0.0
    %1619 = vmatmul.mubr.f32.gmra.mrb[0].mxu0 %v1517
    %v1620 = vpop.f32.mrb[0].mxu0
    %v1621 = vadd.f32 0.0, %v1620
    %v1622 = vpop.f32.mrb[0].mxu0
    %1623 = vdwg.mxu0
    %v1624 = vmul.f32 %v1586, %v176
    %v1625 = vmul.f32 %v1591, %v177
    %v1626 = vmul.f32 %v1596, %v178
    %v1627 = vmul.f32 %v1601, %v179
    %v1628 = vmul.f32 %v1606, %v180
    %v1629 = vmul.f32 %v1611, %v181
    %v1630 = vmul.f32 %v1616, %v182
    %v1631 = vmul.f32 %v1621, %v183
    %1632 = vmatprep.subr.mxu0 0.0
    %1633 = vmatpush1.msra.mxu0 %v1624
    %1634 = vmatprep.subr.mxu0 0.0
    %1635 = vmatpush1.msra.mxu0 %v1625
    %1636 = vmatprep.subr.mxu0 0.0
    %1637 = vmatpush1.msra.mxu0 %v1626
    %1638 = vmatprep.subr.mxu0 0.0
    %1639 = vmatpush1.msra.mxu0 %v1627
    %1640 = vmatprep.subr.mxu0 0.0
    %1641 = vmatpush1.msra.mxu0 %v1628
    %1642 = vmatprep.subr.mxu0 0.0
    %1643 = vmatpush1.msra.mxu0 %v1629
    %1644 = vmatprep.subr.mxu0 0.0
    %1645 = vmatpush1.msra.mxu0 %v1630
    %1646 = vmatprep.subr.mxu0 0.0
    %1647 = vmatpush1.msra.mxu0 %v1631
    %1648 = vmatprep.subr.mxu0 0.0
    %1649 = vmatpush1.msra.mxu0 0.0
    %1650 = vmatprep.subr.mxu0 0.0
    %1651 = vmatpush1.msra.mxu0 0.0
    %1652 = vmatprep.subr.mxu0 0.0
    %1653 = vmatpush1.msra.mxu0 0.0
    %1654 = vmatprep.subr.mxu0 0.0
    %1655 = vmatpush1.msra.mxu0 0.0
    %1656 = vmatprep.subr.mxu0 0.0
    %1657 = vmatpush1.msra.mxu0 0.0
    %1658 = vmatprep.subr.mxu0 0.0
    %1659 = vmatpush1.msra.mxu0 0.0
    %1660 = vmatprep.subr.mxu0 0.0
    %1661 = vmatpush1.msra.mxu0 0.0
    %1662 = vmatprep.subr.mxu0 0.0
    %1663 = vmatpush1.msra.mxu0 0.0
    %1664 = vmatprep.subr.mxu0 0.0
    %1665 = vmatpush1.msra.mxu0 0.0
    %1666 = vmatprep.subr.mxu0 0.0
    %1667 = vmatpush1.msra.mxu0 0.0
    %1668 = vmatprep.subr.mxu0 0.0
    %1669 = vmatpush1.msra.mxu0 0.0
    %1670 = vmatprep.subr.mxu0 0.0
    %1671 = vmatpush1.msra.mxu0 0.0
    %1672 = vmatprep.subr.mxu0 0.0
    %1673 = vmatpush1.msra.mxu0 0.0
    %1674 = vmatprep.subr.mxu0 0.0
    %1675 = vmatpush1.msra.mxu0 0.0
    %1676 = vmatprep.subr.mxu0 0.0
    %1677 = vmatpush1.msra.mxu0 0.0
    %1678 = vmatprep.subr.mxu0 0.0
    %1679 = vmatpush1.msra.mxu0 0.0
    %1680 = vmatprep.subr.mxu0 0.0
    %1681 = vmatpush1.msra.mxu0 0.0
    %1682 = vmatprep.subr.mxu0 0.0
    %1683 = vmatpush1.msra.mxu0 0.0
    %1684 = vmatprep.subr.mxu0 0.0
    %1685 = vmatpush1.msra.mxu0 0.0
    %1686 = vmatprep.subr.mxu0 0.0
    %1687 = vmatpush1.msra.mxu0 0.0
    %1688 = vmatprep.subr.mxu0 0.0
    %1689 = vmatpush1.msra.mxu0 0.0
    %1690 = vmatprep.subr.mxu0 0.0
    %1691 = vmatpush1.msra.mxu0 0.0
    %1692 = vmatprep.subr.mxu0 0.0
    %1693 = vmatpush1.msra.mxu0 0.0
    %1694 = vmatprep.subr.mxu0 0.0
    %1695 = vmatpush1.msra.mxu0 0.0
    %1696 = vmatprep.mubr.f32.mxu0 0.0
    %1697 = vmatmul.mubr.f32.gmra.mrb[0].mxu0 %v708
    %v1698 = vpop.f32.mrb[0].mxu0
    %v1699 = vadd.f32 0.0, %v1698
    %v1700 = vpop.f32.mrb[0].mxu0
    %1701 = vmatprep.mubr.f32.mxu0 0.0
    %1702 = vmatmul.mubr.f32.gmra.mrb[0].mxu0 %v711
    %v1703 = vpop.f32.mrb[0].mxu0
    %v1704 = vadd.f32 0.0, %v1703
    %v1705 = vpop.f32.mrb[0].mxu0
    %1706 = vdwg.mxu0
    %s1707 = scalar_lea.vmem %s10, 32
    %v1708 = vld [vmem:[%s1707] sm:$0xff]
    %v1709 = vld [vmem:[%s1707 + $0x8] sm:$0xff]
    %v1710 = vld [vmem:[%s1707 + $0x10] sm:$0xff]
    %v1711 = vld [vmem:[%s1707 + $0x18] sm:$0xff]
    %s1712 = scalar_lea.vmem %s11, 1
    %v1713 = vld [vmem:[%s1712] sm:$0x1]
    %v1715 = vlaneseq
    %v1716 = vshrl.u32 %v1715, 7
    %v1717 = vsub.s32 0, %v1716
    %v1718 = vrot.slane %v1713, %v1717
    %v1721 = vsel %vm188, %v1699, 0
    %v1724 = vsel %vm188, %v1704, 0
    %1726 = vmatprep.subr.mxu0 0.0
    %1727 = vmatpush1.msra.mxu0 %v1708
    %1728 = vmatprep.subr.mxu0 0.0
    %1729 = vmatpush1.msra.mxu0 %v1709
    %1730 = vmatprep.subr.mxu0 0.0
    %1731 = vmatpush1.msra.mxu0 %v1710
    %1732 = vmatprep.subr.mxu0 0.0
    %1733 = vmatpush1.msra.mxu0 %v1711
    %1734 = vmatprep.subr.mxu0 0.0
    %1735 = vmatpush1.msra.mxu0 0.0
    %1736 = vmatprep.subr.mxu0 0.0
    %1737 = vmatpush1.msra.mxu0 0.0
    %1738 = vmatprep.subr.mxu0 0.0
    %1739 = vmatpush1.msra.mxu0 0.0
    %1740 = vmatprep.subr.mxu0 0.0
    %1741 = vmatpush1.msra.mxu0 0.0
    %1742 = vmatprep.subr.mxu0 0.0
    %1743 = vmatpush1.msra.mxu0 0.0
    %1744 = vmatprep.subr.mxu0 0.0
    %1745 = vmatpush1.msra.mxu0 0.0
    %1746 = vmatprep.subr.mxu0 0.0
    %1747 = vmatpush1.msra.mxu0 0.0
    %1748 = vmatprep.subr.mxu0 0.0
    %1749 = vmatpush1.msra.mxu0 0.0
    %1750 = vmatprep.subr.mxu0 0.0
    %1751 = vmatpush1.msra.mxu0 0.0
    %1752 = vmatprep.subr.mxu0 0.0
    %1753 = vmatpush1.msra.mxu0 0.0
    %1754 = vmatprep.subr.mxu0 0.0
    %1755 = vmatpush1.msra.mxu0 0.0
    %1756 = vmatprep.subr.mxu0 0.0
    %1757 = vmatpush1.msra.mxu0 0.0
    %1758 = vmatprep.subr.mxu0 0.0
    %1759 = vmatpush1.msra.mxu0 0.0
    %1760 = vmatprep.subr.mxu0 0.0
    %1761 = vmatpush1.msra.mxu0 0.0
    %1762 = vmatprep.subr.mxu0 0.0
    %1763 = vmatpush1.msra.mxu0 0.0
    %1764 = vmatprep.subr.mxu0 0.0
    %1765 = vmatpush1.msra.mxu0 0.0
    %1766 = vmatprep.subr.mxu0 0.0
    %1767 = vmatpush1.msra.mxu0 0.0
    %1768 = vmatprep.subr.mxu0 0.0
    %1769 = vmatpush1.msra.mxu0 0.0
    %1770 = vmatprep.subr.mxu0 0.0
    %1771 = vmatpush1.msra.mxu0 0.0
    %1772 = vmatprep.subr.mxu0 0.0
    %1773 = vmatpush1.msra.mxu0 0.0
    %1774 = vmatprep.subr.mxu0 0.0
    %1775 = vmatpush1.msra.mxu0 0.0
    %1776 = vmatprep.subr.mxu0 0.0
    %1777 = vmatpush1.msra.mxu0 0.0
    %1778 = vmatprep.subr.mxu0 0.0
    %1779 = vmatpush1.msra.mxu0 0.0
    %1780 = vmatprep.subr.mxu0 0.0
    %1781 = vmatpush1.msra.mxu0 0.0
    %1782 = vmatprep.subr.mxu0 0.0
    %1783 = vmatpush1.msra.mxu0 0.0
    %1784 = vmatprep.subr.mxu0 0.0
    %1785 = vmatpush1.msra.mxu0 0.0
    %1786 = vmatprep.subr.mxu0 0.0
    %1787 = vmatpush1.msra.mxu0 0.0
    %1788 = vmatprep.subr.mxu0 0.0
    %1789 = vmatpush1.msra.mxu0 0.0
    %1790 = vmatprep.mubr.f32.mxu0 0.0
    %1791 = vmatmul.mubr.f32.gmra.mrb[0].mxu0 %v1721
    %v1792 = vpop.f32.mrb[0].mxu0
    %v1793 = vadd.f32 %v1718, %v1792
    %v1794 = vpop.f32.mrb[0].mxu0
    %1795 = vmatprep.mubr.f32.mxu0 0.0
    %1796 = vmatmul.mubr.f32.gmra.mrb[0].mxu0 %v1724
    %v1797 = vpop.f32.mrb[0].mxu0
    %v1798 = vadd.f32 %v1718, %v1797
    %v1799 = vpop.f32.mrb[0].mxu0
    %1800 = vdwg.mxu0
    %v1801 = vadd.f32 %v1108, %v1793
    %v1802 = vadd.f32 %v1109, %v1798
    %v1803 = vsel %vm188, %v1801, 0.0
    %1804 = vadd.xlane.f32.xlu0 %v1803
    %v1805 = vpop.xlane.xlu0 %1804
    %v1806 = vsel %vm188, %v1802, 0.0
    %1807 = vadd.xlane.f32.xlu0 %v1806
    %v1808 = vpop.xlane.xlu0 %1807
    %v1809 = vmul.f32 %v1805, %v195
    %v1810 = vmul.f32 %v1808, %v195
    %v1811 = vmul.f32 %v1801, %v1801
    %v1812 = vmul.f32 %v1802, %v1802
    %v1813 = vsel %vm188, %v1811, 0.0
    %1814 = vadd.xlane.f32.xlu0 %v1813
    %v1815 = vpop.xlane.xlu0 %1814
    %v1816 = vsel %vm188, %v1812, 0.0
    %1817 = vadd.xlane.f32.xlu0 %v1816
    %v1818 = vpop.xlane.xlu0 %1817
    %v1819 = vmul.f32 %v1815, %v195
    %v1820 = vmul.f32 %v1818, %v195
    %v1821 = vmul.f32 %v1809, %v1809
    %v1822 = vmul.f32 %v1810, %v1810
    %v1823 = vsub.f32 %v1819, %v1821
    %v1824 = vsub.f32 %v1820, %v1822
    %v1825 = vsub.f32 %v1801, %v1809
    %v1826 = vsub.f32 %v1802, %v1810
    %v1827 = vadd.f32 %v1823, 32.0
    %v1828 = vadd.f32 %v1824, 32.0
    %v1829 = vrsqrt.pop %v1827
    %v1830 = vrsqrt.pop %v1828
    %v1831 = vmul.f32 %v1825, %v1829
    %v1832 = vmul.f32 %v1826, %v1830
    %v1833 = vmul.f32 %v1831, %v1148
    %v1834 = vmul.f32 %v1832, %v1148
    %v1835 = vadd.f32 %v1833, %v1156
    %v1836 = vadd.f32 %v1834, %v1156
    %s1837 = scalar_lea.vmem %s12, 32
    %v1838 = vld [vmem:[%s1837] sm:$0xff]
    %v1839 = vld [vmem:[%s1837 + $0x8] sm:$0xff]
    %v1840 = vld [vmem:[%s1837 + $0x10] sm:$0xff]
    %v1841 = vld [vmem:[%s1837 + $0x18] sm:$0xff]
    %s1842 = scalar_lea.vmem %s13, 1
    %v1843 = vld [vmem:[%s1842] sm:$0x1]
    %v1845 = vlaneseq
    %v1846 = vshrl.u32 %v1845, 7
    %v1847 = vsub.s32 0, %v1846
    %v1848 = vrot.slane %v1843, %v1847
    %v1851 = vsel %vm188, %v1835, 0
    %v1854 = vsel %vm188, %v1836, 0
    %1856 = vmatprep.subr.mxu0 0.0
    %1857 = vmatpush1.msra.mxu0 %v1838
    %1858 = vmatprep.subr.mxu0 0.0
    %1859 = vmatpush1.msra.mxu0 %v1839
    %1860 = vmatprep.subr.mxu0 0.0
    %1861 = vmatpush1.msra.mxu0 %v1840
    %1862 = vmatprep.subr.mxu0 0.0
    %1863 = vmatpush1.msra.mxu0 %v1841
    %1864 = vmatprep.subr.mxu0 0.0
    %1865 = vmatpush1.msra.mxu0 0.0
    %1866 = vmatprep.subr.mxu0 0.0
    %1867 = vmatpush1.msra.mxu0 0.0
    %1868 = vmatprep.subr.mxu0 0.0
    %1869 = vmatpush1.msra.mxu0 0.0
    %1870 = vmatprep.subr.mxu0 0.0
    %1871 = vmatpush1.msra.mxu0 0.0
    %1872 = vmatprep.subr.mxu0 0.0
    %1873 = vmatpush1.msra.mxu0 0.0
    %1874 = vmatprep.subr.mxu0 0.0
    %1875 = vmatpush1.msra.mxu0 0.0
    %1876 = vmatprep.subr.mxu0 0.0
    %1877 = vmatpush1.msra.mxu0 0.0
    %1878 = vmatprep.subr.mxu0 0.0
    %1879 = vmatpush1.msra.mxu0 0.0
    %1880 = vmatprep.subr.mxu0 0.0
    %1881 = vmatpush1.msra.mxu0 0.0
    %1882 = vmatprep.subr.mxu0 0.0
    %1883 = vmatpush1.msra.mxu0 0.0
    %1884 = vmatprep.subr.mxu0 0.0
    %1885 = vmatpush1.msra.mxu0 0.0
    %1886 = vmatprep.subr.mxu0 0.0
    %1887 = vmatpush1.msra.mxu0 0.0
    %1888 = vmatprep.subr.mxu0 0.0
    %1889 = vmatpush1.msra.mxu0 0.0
    %1890 = vmatprep.subr.mxu0 0.0
    %1891 = vmatpush1.msra.mxu0 0.0
    %1892 = vmatprep.subr.mxu0 0.0
    %1893 = vmatpush1.msra.mxu0 0.0
    %1894 = vmatprep.subr.mxu0 0.0
    %1895 = vmatpush1.msra.mxu0 0.0
    %1896 = vmatprep.subr.mxu0 0.0
    %1897 = vmatpush1.msra.mxu0 0.0
    %1898 = vmatprep.subr.mxu0 0.0
    %1899 = vmatpush1.msra.mxu0 0.0
    %1900 = vmatprep.subr.mxu0 0.0
    %1901 = vmatpush1.msra.mxu0 0.0
    %1902 = vmatprep.subr.mxu0 0.0
    %1903 = vmatpush1.msra.mxu0 0.0
    %1904 = vmatprep.subr.mxu0 0.0
    %1905 = vmatpush1.msra.mxu0 0.0
    %1906 = vmatprep.subr.mxu0 0.0
    %1907 = vmatpush1.msra.mxu0 0.0
    %1908 = vmatprep.subr.mxu0 0.0
    %1909 = vmatpush1.msra.mxu0 0.0
    %1910 = vmatprep.subr.mxu0 0.0
    %1911 = vmatpush1.msra.mxu0 0.0
    %1912 = vmatprep.subr.mxu0 0.0
    %1913 = vmatpush1.msra.mxu0 0.0
    %1914 = vmatprep.subr.mxu0 0.0
    %1915 = vmatpush1.msra.mxu0 0.0
    %1916 = vmatprep.subr.mxu0 0.0
    %1917 = vmatpush1.msra.mxu0 0.0
    %1918 = vmatprep.subr.mxu0 0.0
    %1919 = vmatpush1.msra.mxu0 0.0
    %1920 = vmatprep.mubr.f32.mxu0 0.0
    %1921 = vmatmul.mubr.f32.gmra.mrb[0].mxu0 %v1851
    %v1922 = vpop.f32.mrb[0].mxu0
    %v1923 = vadd.f32 %v1848, %v1922
    %v1924 = vpop.f32.mrb[0].mxu0
    %1925 = vmatprep.mubr.f32.mxu0 0.0
    %1926 = vmatmul.mubr.f32.gmra.mrb[0].mxu0 %v1854
    %v1927 = vpop.f32.mrb[0].mxu0
    %v1928 = vadd.f32 %v1848, %v1927
    %v1929 = vpop.f32.mrb[0].mxu0
    %1930 = vdwg.mxu0
    %v1931 = vmax.f32 %v1923, 0.0
    %v1932 = vmax.f32 %v1928, 0.0
    %s1933 = scalar_lea.vmem %s14, 64
    %v1934 = vld [vmem:[%s1933] sm:$0xff]
    %v1935 = vld [vmem:[%s1933 + $0x8] sm:$0xff]
    %v1936 = vld [vmem:[%s1933 + $0x10] sm:$0xff]
    %v1937 = vld [vmem:[%s1933 + $0x18] sm:$0xff]
    %v1938 = vld [vmem:[%s1933 + $0x20] sm:$0xff]
    %v1939 = vld [vmem:[%s1933 + $0x28] sm:$0xff]
    %v1940 = vld [vmem:[%s1933 + $0x30] sm:$0xff]
    %v1941 = vld [vmem:[%s1933 + $0x38] sm:$0xff]
    %v1943 = vsel %vm86, %v1931, 0
    %v1946 = vsel %vm86, %v1932, 0
    %1948 = vmatprep.subr.mxu0 0.0
    %1949 = vmatpush1.msra.mxu0 %v1934
    %1950 = vmatprep.subr.mxu0 0.0
    %1951 = vmatpush1.msra.mxu0 %v1935
    %1952 = vmatprep.subr.mxu0 0.0
    %1953 = vmatpush1.msra.mxu0 %v1936
    %1954 = vmatprep.subr.mxu0 0.0
    %1955 = vmatpush1.msra.mxu0 %v1937
    %1956 = vmatprep.subr.mxu0 0.0
    %1957 = vmatpush1.msra.mxu0 %v1938
    %1958 = vmatprep.subr.mxu0 0.0
    %1959 = vmatpush1.msra.mxu0 %v1939
    %1960 = vmatprep.subr.mxu0 0.0
    %1961 = vmatpush1.msra.mxu0 %v1940
    %1962 = vmatprep.subr.mxu0 0.0
    %1963 = vmatpush1.msra.mxu0 %v1941
    %1964 = vmatprep.subr.mxu0 0.0
    %1965 = vmatpush1.msra.mxu0 0.0
    %1966 = vmatprep.subr.mxu0 0.0
    %1967 = vmatpush1.msra.mxu0 0.0
    %1968 = vmatprep.subr.mxu0 0.0
    %1969 = vmatpush1.msra.mxu0 0.0
    %1970 = vmatprep.subr.mxu0 0.0
    %1971 = vmatpush1.msra.mxu0 0.0
    %1972 = vmatprep.subr.mxu0 0.0
    %1973 = vmatpush1.msra.mxu0 0.0
    %1974 = vmatprep.subr.mxu0 0.0
    %1975 = vmatpush1.msra.mxu0 0.0
    %1976 = vmatprep.subr.mxu0 0.0
    %1977 = vmatpush1.msra.mxu0 0.0
    %1978 = vmatprep.subr.mxu0 0.0
    %1979 = vmatpush1.msra.mxu0 0.0
    %1980 = vmatprep.subr.mxu0 0.0
    %1981 = vmatpush1.msra.mxu0 0.0
    %1982 = vmatprep.subr.mxu0 0.0
    %1983 = vmatpush1.msra.mxu0 0.0
    %1984 = vmatprep.subr.mxu0 0.0
    %1985 = vmatpush1.msra.mxu0 0.0
    %1986 = vmatprep.subr.mxu0 0.0
    %1987 = vmatpush1.msra.mxu0 0.0
    %1988 = vmatprep.subr.mxu0 0.0
    %1989 = vmatpush1.msra.mxu0 0.0
    %1990 = vmatprep.subr.mxu0 0.0
    %1991 = vmatpush1.msra.mxu0 0.0
    %1992 = vmatprep.subr.mxu0 0.0
    %1993 = vmatpush1.msra.mxu0 0.0
    %1994 = vmatprep.subr.mxu0 0.0
    %1995 = vmatpush1.msra.mxu0 0.0
    %1996 = vmatprep.subr.mxu0 0.0
    %1997 = vmatpush1.msra.mxu0 0.0
    %1998 = vmatprep.subr.mxu0 0.0
    %1999 = vmatpush1.msra.mxu0 0.0
    %2000 = vmatprep.subr.mxu0 0.0
    %2001 = vmatpush1.msra.mxu0 0.0
    %2002 = vmatprep.subr.mxu0 0.0
    %2003 = vmatpush1.msra.mxu0 0.0
    %2004 = vmatprep.subr.mxu0 0.0
    %2005 = vmatpush1.msra.mxu0 0.0
    %2006 = vmatprep.subr.mxu0 0.0
    %2007 = vmatpush1.msra.mxu0 0.0
    %2008 = vmatprep.subr.mxu0 0.0
    %2009 = vmatpush1.msra.mxu0 0.0
    %2010 = vmatprep.subr.mxu0 0.0
    %2011 = vmatpush1.msra.mxu0 0.0
    %2012 = vmatprep.mubr.f32.mxu0 0.0
    %2013 = vmatmul.mubr.f32.gmra.mrb[0].mxu0 %v1943
    %v2014 = vpop.f32.mrb[0].mxu0
    %v2015 = vadd.f32 0.0, %v2014
    %v2016 = vpop.f32.mrb[0].mxu0
    %2017 = vmatprep.mubr.f32.mxu0 0.0
    %2018 = vmatmul.mubr.f32.gmra.mrb[0].mxu0 %v1946
    %v2019 = vpop.f32.mrb[0].mxu0
    %v2020 = vadd.f32 0.0, %v2019
    %v2021 = vpop.f32.mrb[0].mxu0
    %2022 = vdwg.mxu0
    %v2023 = vadd.f32 %v1801, %v2015
    %v2024 = vadd.f32 %v1802, %v2020
    %s2025 = scalar_lea.vmem %s15, 1
    %v2026 = vld [vmem:[%s2025] sm:$0x1]
    %v2028 = vlaneseq
    %v2029 = vshrl.u32 %v2028, 7
    %v2030 = vsub.s32 0, %v2029
    %v2031 = vrot.slane %v2026, %v2030
    %v2033 = vadd.f32 %v2023, %v2031
    %v2034 = vadd.f32 %v2024, %v2031
    %v2035 = vld [vmem:[%s16] sm:$0x1]
    %v2036 = vld [vmem:[%s17] sm:$0x1]
    %v2037 = vsel %vm188, %v2033, 0.0
    %2038 = vadd.xlane.f32.xlu0 %v2037
    %v2039 = vpop.xlane.xlu0 %2038
    %v2040 = vsel %vm188, %v2034, 0.0
    %2041 = vadd.xlane.f32.xlu0 %v2040
    %v2042 = vpop.xlane.xlu0 %2041
    %v2043 = vmul.f32 %v2039, %v195
    %v2044 = vmul.f32 %v2042, %v195
    %v2045 = vmul.f32 %v2033, %v2033
    %v2046 = vmul.f32 %v2034, %v2034
    %v2047 = vsel %vm188, %v2045, 0.0
    %2048 = vadd.xlane.f32.xlu0 %v2047
    %v2049 = vpop.xlane.xlu0 %2048
    %v2050 = vsel %vm188, %v2046, 0.0
    %2051 = vadd.xlane.f32.xlu0 %v2050
    %v2052 = vpop.xlane.xlu0 %2051
    %v2053 = vmul.f32 %v2049, %v195
    %v2054 = vmul.f32 %v2052, %v195
    %v2055 = vmul.f32 %v2043, %v2043
    %v2056 = vmul.f32 %v2044, %v2044
    %v2057 = vsub.f32 %v2053, %v2055
    %v2058 = vsub.f32 %v2054, %v2056
    %v2059 = vmax.f32 %v2057, 0.0
    %v2060 = vmax.f32 %v2058, 0.0
    %v2061 = vsub.f32 %v2033, %v2043
    %v2062 = vsub.f32 %v2034, %v2044
    %v2063 = vadd.f32 %v2059, 1e-06
    %v2064 = vadd.f32 %v2060, 1e-06
    %v2065 = vrsqrt.pop %v2063
    %v2066 = vrsqrt.pop %v2064
    %v2067 = vmul.f32 %v2061, %v2065
    %v2068 = vmul.f32 %v2062, %v2066
    %v2070 = vlaneseq
    %v2071 = vshrl.u32 %v2070, 7
    %v2072 = vsub.s32 0, %v2071
    %v2073 = vrot.slane %v2035, %v2072
    %v2075 = vmul.f32 %v2067, %v2073
    %v2076 = vmul.f32 %v2068, %v2073
    %v2078 = vlaneseq
    %v2079 = vshrl.u32 %v2078, 7
    %v2080 = vsub.s32 0, %v2079
    %v2081 = vrot.slane %v2036, %v2080
    %v2083 = vadd.f32 %v2075, %v2081
    %v2084 = vadd.f32 %v2076, %v2081
    %2085 = vst.msk [vmem:[#allocation2] sm:$0xff] %vm188, %v2083
    %2086 = vst.msk [vmem:[#allocation2 + $0x8] sm:$0xff] %vm188, %v2084
    // Predicated region
    $region74: #{encoder_forward.1} parent=1 // pred_check
      _
    $region75: #{encoder_forward.1} parent=1 // pred_check_branch
      %2088 = sbr.rel (0) target = $region77
    $region76: #{encoder_forward.1} parent=1 // pred_region
      %s2090 = ssub.s32 256, 256
      %2091 = vsyncadd [#allocation3], %s2090
      %s2092 = sshll.u32 [#allocation2], 4
      %s2093 = int_to_ptr.vmem [resolvable:$true] %s2092
      %2098 = dma.vmem_to_hbm [thread:$0]  %s2093, 256, %s18, [#allocation3], 128, 128, 8
    $region77: #{encoder_forward.1} parent=1 // pred_fallthru
      _
    // Predicated region
    $region78: #{encoder_forward.1} parent=1 // pred_check
      _
    $region79: #{encoder_forward.1} parent=1 // pred_check_branch
      %2100 = sbr.rel (0) target = $region81
    $region80: #{encoder_forward.1} parent=1 // pred_region
      %2101 = dma.done [#allocation3], 256
    $region81: #{encoder_forward.1} parent=1 // pred_fallthru
      _
    %2102 = vsyncpa [#allocation3], 1

</llo_original>
